<compile_context>
chip_gen: v7x
topology: tpu7x:2x2x1
jax: 0.10.0
libtpu: 0.0.40
codegen_flags: <defaults>
</compile_context>

<pallas_src>
import functools

import jax
import jax.numpy as jnp
from jax.experimental import pallas as pl
from jax.experimental.pallas import tpu as pltpu


# ----------------------------- RoPE helpers (plain JAX, elementwise) ---------

def _rotate_half(x):
    # new[..., 0::2] = x[..., 1::2]; new[..., 1::2] = -x[..., 0::2]
    x0 = x[..., 0::2]
    x1 = x[..., 1::2]
    return jnp.stack([x1, -x0], axis=-1).reshape(x.shape)


def _rope_tables(hw_shape, head_dim, ratio, theta):
    H, W = hw_shape
    dim = head_dim // 2
    nf = dim // 2
    freqs = theta ** (-(jnp.arange(0, dim, 2, dtype=jnp.float32)[:nf]) / dim)
    ys = jnp.arange(H, dtype=jnp.float32) * ratio
    xs = jnp.arange(W, dtype=jnp.float32) * ratio
    ys, xs = jnp.meshgrid(ys, xs, indexing="ij")            # (H, W)
    freqs_h = ys[..., None] * freqs                         # (H, W, nf)
    freqs_w = xs[..., None] * freqs                         # (H, W, nf)
    f = jnp.concatenate([freqs_h, freqs_w], axis=-1)        # (H, W, dim)
    f = f.reshape(H * W, 1, dim)
    f = jnp.repeat(f, 2, axis=-1)                           # (HW, 1, head_dim)
    return jnp.cos(f), jnp.sin(f)


def _round_up(x, m):
    return ((x + m - 1) // m) * m


def _q_tile_cap():
    # v6e/v7x MXU is 256 wide -> TQ up to 256 fills the M dimension;
    # v5e's MXU is 128 wide, so don't push past 128 there.
    try:
        kind = jax.devices()[0].device_kind.lower()
        if "v5e" in kind or "v5 lite" in kind or "v5lite" in kind:
            return 128
    except Exception:
        pass
    return 256


# ----------------------------- Pallas flash-attention kernel -----------------

def _flash_attn_kernel(q_ref, k_ref, v_ref, o_ref, m_sc, l_sc, acc_sc,
                       *, scale, kv_len, tkv):
    """One (sample, q-tile) block; kv tiles stream along grid axis 2.

    q_ref:   (nh, TQ,  d)  native dtype
    k_ref:   (nh, TKV, d)
    v_ref:   (nh, TKV, d)
    o_ref:   (TQ, nh*d)    lane-dense, head-merge fused into the store
    m/l/acc: f32 online-softmax state (VMEM scratch), persists over kv axis
    """
    kv = pl.program_id(2)

    @pl.when(kv == 0)
    def _init():
        m_sc[...] = jnp.full(m_sc.shape, -jnp.inf, dtype=jnp.float32)
        l_sc[...] = jnp.zeros(l_sc.shape, dtype=jnp.float32)
        acc_sc[...] = jnp.zeros(acc_sc.shape, dtype=jnp.float32)

    # Native-dtype MXU inputs, f32 accumulation. Scale q (cheap: nh*TQ*d).
    q = q_ref[...] * scale
    s = jnp.einsum("hqd,hkd->hqk", q, k_ref[...],
                   preferred_element_type=jnp.float32)       # (nh, TQ, TKV) f32

    if kv_len % tkv != 0:
        # Mask zero-padded kv positions (only traced when hw % TKV != 0).
        col = kv * tkv + jax.lax.broadcasted_iota(jnp.int32, s.shape, 2)
        s = jnp.where(col < kv_len, s, -jnp.inf)

    m_prev = m_sc[...]
    m_new = jnp.maximum(m_prev, jnp.max(s, axis=-1, keepdims=True))
    alpha = jnp.exp(m_prev - m_new)
    p = jnp.exp(s - m_new)
    l_sc[...] = alpha * l_sc[...] + jnp.sum(p, axis=-1, keepdims=True)
    acc_sc[...] = alpha * acc_sc[...] + jnp.einsum(
        "hqk,hkd->hqd", p.astype(v_ref.dtype), v_ref[...],
        preferred_element_type=jnp.float32)
    m_sc[...] = m_new

    @pl.when(kv == pl.num_programs(2) - 1)
    def _finalize():
        # Normalize once in the epilogue (EUP reciprocal on the accumulator,
        # TQ*d multiplies instead of TQ*Lk) and fuse the 'nh q d -> q (nh d)'
        # head-merge so the output block store is lane-dense over C.
        o = acc_sc[...] * pl.reciprocal(l_sc[...], approx=True)   # (nh, TQ, d)
        nh = o.shape[0]
        o_ref[...] = jnp.concatenate(
            [o[h].astype(o_ref.dtype) for h in range(nh)], axis=-1)


def _block_diag_flash_attention(q_pad, k_b, v_b, scale, hw, tq, tkv):
    """q_pad: (B, nh, Lp, d), k_b/v_b: (B, nh, hw_pad, d) -> (B, Lp, nh*d)."""
    B, nh, Lp, d = q_pad.shape
    hw_pad = k_b.shape[2]
    C = nh * d
    n_q = Lp // tq
    n_kv = hw_pad // tkv

    itemsize = q_pad.dtype.itemsize
    cost = pl.CostEstimate(
        flops=int(4 * B * nh * Lp * hw_pad * d),
        transcendentals=int(B * nh * Lp * hw_pad),
        bytes_accessed=int((q_pad.size + n_q * (k_b.size + v_b.size)
                            + B * Lp * C) * itemsize),
    )

    return pl.pallas_call(
        functools.partial(_flash_attn_kernel, scale=scale, kv_len=hw, tkv=tkv),
        out_shape=jax.ShapeDtypeStruct((B, Lp, C), q_pad.dtype),
        grid_spec=pltpu.PrefetchScalarGridSpec(
            num_scalar_prefetch=0,
            grid=(B, n_q, n_kv),
            in_specs=[
                pl.BlockSpec((pl.Squeezed(), nh, tq, d),
                             lambda b, iq, kv: (b, 0, iq, 0)),
                pl.BlockSpec((pl.Squeezed(), nh, tkv, d),
                             lambda b, iq, kv: (b, 0, kv, 0)),
                pl.BlockSpec((pl.Squeezed(), nh, tkv, d),
                             lambda b, iq, kv: (b, 0, kv, 0)),
            ],
            out_specs=pl.BlockSpec((pl.Squeezed(), tq, C),
                                   lambda b, iq, kv: (b, iq, 0)),
            scratch_shapes=[
                pltpu.VMEM((nh, tq, 1), jnp.float32),   # running max m
                pltpu.VMEM((nh, tq, 1), jnp.float32),   # running sum l
                pltpu.VMEM((nh, tq, d), jnp.float32),   # output accumulator
            ],
        ),
        compiler_params=pltpu.CompilerParams(
            dimension_semantics=("parallel", "parallel", "arbitrary"),
            vmem_limit_bytes=48 * 1024 * 1024,
        ),
        cost_estimate=cost,
    )(q_pad, k_b, v_b)


# ----------------------------- Full forward ----------------------------------

def full_attention_forward(q, k, v, lengths, idxs, hw_shape,
                           *, num_heads, ratio=0.5, theta=10000.0):
    """JAX/Pallas equivalent of FullAttention.forward (eval / non-CUDA path).

    q: (L1, C), k: (L2, C), v: (L2, C), lengths: static List[int],
    idxs: (L1,) int indices into the (B*H*W) position grid (or None),
    hw_shape: (H, W).  Returns (L1, C).
    """
    H, W = hw_shape
    hw = H * W
    L1, C = q.shape
    L2 = k.shape[0]
    B = len(lengths)
    assert L2 == B * hw, "k/v token count must be B * H * W"
    nh = num_heads
    d = C // nh
    scale = d ** (-0.5)

    # --- split heads ----------------------------------------------------------
    qh = q.reshape(L1, nh, d)
    kh = k.reshape(B, hw, nh, d)

    # --- 2-D axial RoPE (elementwise, kept in the wrapper) --------------------
    cos, sin = _rope_tables(hw_shape, d, ratio, theta)       # (hw, 1, d)
    if idxs is not None:
        pos = jnp.mod(idxs.astype(jnp.int32), hw)            # no B-tiled tables
    else:
        pos = jnp.arange(L1, dtype=jnp.int32) % hw
    qh = (qh * cos[pos] + _rotate_half(qh) * sin[pos]).astype(q.dtype)
    kh = (kh * cos[None] + _rotate_half(kh) * sin[None]).astype(k.dtype)

    # --- tile sizes ------------------------------------------------------------
    Lmax = max(lengths)
    tq = min(_round_up(Lmax, 8), _q_tile_cap())
    Lp = _round_up(Lmax, tq)
    tkv = min(_round_up(hw, 8), 512)
    hw_pad = _round_up(hw, tkv)

    # --- pack q per sample into (B, nh, Lp, d) ---------------------------------
    # TODO(synk): replace with scalar-prefetch ragged indexing (see header).
    q_t = jnp.transpose(qh, (1, 0, 2))                       # (nh, L1, d)
    q_samples = []
    off = 0
    for L in lengths:
        qi = q_t[:, off:off + L, :]
        q_samples.append(jnp.pad(qi, ((0, 0), (0, Lp - L), (0, 0))))
        off += L
    q_pad = jnp.stack(q_samples, axis=0)                     # (B, nh, Lp, d)

    # --- k/v to (B, nh, hw_pad, d) ---------------------------------------------
    k_b = jnp.transpose(kh, (0, 2, 1, 3))                    # (B, nh, hw, d)
    v_b = jnp.transpose(v.reshape(B, hw, nh, d), (0, 2, 1, 3))
    if hw_pad != hw:
        pad = ((0, 0), (0, 0), (0, hw_pad - hw), (0, 0))
        k_b = jnp.pad(k_b, pad)
        v_b = jnp.pad(v_b, pad)

    out_pad = _block_diag_flash_attention(q_pad, k_b, v_b, scale, hw, tq, tkv)

    # --- un-pad per sample (head merge already fused inside the kernel) --------
    outs = [out_pad[i, :L, :] for i, L in enumerate(lengths)]
    return jnp.concatenate(outs, axis=0)


# ----------------------------- Pure-JAX reference -----------------------------

def _reference_full_attention(q, k, v, lengths, idxs, hw_shape,
                              num_heads, ratio, theta):
    H, W = hw_shape
    hw = H * W
    L1, C = q.shape
    L2 = k.shape[0]
    B = len(lengths)
    nh = num_heads
    d = C // nh
    scale = d ** (-0.5)

    cos, sin = _rope_tables(hw_shape, d, ratio, theta)
    cos_full = jnp.tile(cos, (B, 1, 1))
    sin_full = jnp.tile(sin, (B, 1, 1))
    qh = q.reshape(L1, nh, d)
    kh = k.reshape(L2, nh, d)
    vh = v.reshape(L2, nh, d)
    q_cos = cos_full[idxs] if idxs is not None else cos_full
    q_sin = sin_full[idxs] if idxs is not None else sin_full
    qh = qh * q_cos + _rotate_half(qh) * q_sin
    kh = kh * cos_full + _rotate_half(kh) * sin_full
    qt = jnp.transpose(qh, (1, 0, 2))
    kt = jnp.transpose(kh, (1, 0, 2))
    vt = jnp.transpose(vh, (1, 0, 2))

    outs = []
    off = 0
    for i, L in enumerate(lengths):
        qi = qt[:, off:off + L]
        ki = kt[:, i * hw:(i + 1) * hw]
        vi = vt[:, i * hw:(i + 1) * hw]
        attn = jax.nn.softmax(
            jnp.einsum("hld,hkd->hlk", scale * qi, ki), axis=-1)
        oi = jnp.einsum("hlk,hkd->hld", attn, vi)
        outs.append(jnp.transpose(oi, (1, 0, 2)).reshape(L, C))
        off += L
    return jnp.concatenate(outs, axis=0)


# ----------------------------- Test -------------------------------------------

if __name__ == "__main__":
    key = jax.random.PRNGKey(0)
    embed_dim, num_heads = 32, 4
    H, W = 4, 4
    lengths = [8, 12]
    B = len(lengths)
    L1 = sum(lengths)
    L2 = B * H * W

    k1, k2, k3 = jax.random.split(key, 3)
    q = jax.random.normal(k1, (L1, embed_dim), dtype=jnp.float32)
    k = jax.random.normal(k2, (L2, embed_dim), dtype=jnp.float32)
    v = jax.random.normal(k3, (L2, embed_dim), dtype=jnp.float32)
    # q tokens of sample i map to the first lengths[i] grid positions of sample i.
    idxs = jnp.concatenate([jnp.arange(lengths[0], dtype=jnp.int32),
                            H * W + jnp.arange(lengths[1], dtype=jnp.int32)])

    out = full_attention_forward(q, k, v, lengths, idxs, (H, W),
                                 num_heads=num_heads, ratio=0.5, theta=10000.0)
    out = jax.block_until_ready(out)

    ref = _reference_full_attention(q, k, v, lengths, idxs, (H, W),
                                    num_heads, 0.5, 10000.0)

    assert out.shape == (L1, embed_dim), out.shape
    assert out.dtype == q.dtype
    err = float(jnp.max(jnp.abs(out - ref)))
    # approx=True reciprocal + flash accumulation order -> slightly looser tol.
    assert jnp.allclose(out, ref, rtol=2e-2, atol=2e-2), f"max abs err {err}"

    print("KERNEL_OK")
</pallas_src>

<mosaic_0001>
module attributes {stable_mosaic.version = 11 : i64} {
  func.func @_flash_attn_kernel(%arg0: i32, %arg1: i32, %arg2: i32, %arg3: memref<1x4x16x8xf32, #tpu.memory_space<vmem>>, %arg4: memref<1x4x16x8xf32, #tpu.memory_space<vmem>>, %arg5: memref<1x4x16x8xf32, #tpu.memory_space<vmem>>, %arg6: memref<1x16x32xf32, #tpu.memory_space<vmem>>, %arg7: memref<4x16x1xf32, #tpu.memory_space<vmem>>, %arg8: memref<4x16x1xf32, #tpu.memory_space<vmem>>, %arg9: memref<4x16x8xf32, #tpu.memory_space<vmem>>) attributes {dimension_semantics = [#tpu.dimension_semantics<parallel>, #tpu.dimension_semantics<parallel>, #tpu.dimension_semantics<arbitrary>], iteration_bounds = array<i64: 2, 1, 1>, scalar_prefetch = 0 : i64, scratch_operands = 3 : i64, tpu.core_type = #tpu.core_type<tc>, window_params = [{transform_indices = @transform_0, window_bounds = array<i64: 1, 4, 16, 8>}, {transform_indices = @transform_1, window_bounds = array<i64: 1, 4, 16, 8>}, {transform_indices = @transform_2, window_bounds = array<i64: 1, 4, 16, 8>}, {transform_indices = @transform_3, window_bounds = array<i64: 1, 16, 32>}]} {
    %c0_i32 = arith.constant 0 : i32
    %0 = arith.cmpi eq, %arg2, %c0_i32 : i32
    %1 = arith.extui %0 : i1 to i32
    %c0_i32_0 = arith.constant 0 : i32
    %2 = arith.cmpi ne, %1, %c0_i32_0 : i32
    scf.if %2 {
      %cst_36 = arith.constant 0xFF800000 : f32
      %37 = vector.broadcast %cst_36 : f32 to vector<4x16x1xf32>
      %c0_37 = arith.constant 0 : index
      %c0_38 = arith.constant 0 : index
      %c0_39 = arith.constant 0 : index
      %38 = vector.load %arg7[%c0_37, %c0_38, %c0_39] : memref<4x16x1xf32, #tpu.memory_space<vmem>>, vector<4x16x1xf32>
      tpu.vector_store %arg7[%c0_37, %c0_38, %c0_39], %37 {strides = array<i32>} : memref<4x16x1xf32, #tpu.memory_space<vmem>>, vector<4x16x1xf32>,
      %cst_40 = arith.constant 0.000000e+00 : f32
      %39 = vector.broadcast %cst_40 : f32 to vector<4x16x1xf32>
      %c0_41 = arith.constant 0 : index
      %c0_42 = arith.constant 0 : index
      %c0_43 = arith.constant 0 : index
      %40 = vector.load %arg8[%c0_41, %c0_42, %c0_43] : memref<4x16x1xf32, #tpu.memory_space<vmem>>, vector<4x16x1xf32>
      tpu.vector_store %arg8[%c0_41, %c0_42, %c0_43], %39 {strides = array<i32>} : memref<4x16x1xf32, #tpu.memory_space<vmem>>, vector<4x16x1xf32>,
      %cst_44 = arith.constant 0.000000e+00 : f32
      %41 = vector.broadcast %cst_44 : f32 to vector<4x16x8xf32>
      %c0_45 = arith.constant 0 : index
      %c0_46 = arith.constant 0 : index
      %c0_47 = arith.constant 0 : index
      %42 = vector.load %arg9[%c0_45, %c0_46, %c0_47] : memref<4x16x8xf32, #tpu.memory_space<vmem>>, vector<4x16x8xf32>
      tpu.vector_store %arg9[%c0_45, %c0_46, %c0_47], %41 {strides = array<i32>} : memref<4x16x8xf32, #tpu.memory_space<vmem>>, vector<4x16x8xf32>,
    } else {
    }
    %c0 = arith.constant 0 : index
    %c0_1 = arith.constant 0 : index
    %c0_2 = arith.constant 0 : index
    %c0_3 = arith.constant 0 : index
    %3 = vector.load %arg3[%c0, %c0_1, %c0_2, %c0_3] : memref<1x4x16x8xf32, #tpu.memory_space<vmem>>, vector<1x4x16x8xf32>
    %4 = vector.shape_cast %3 : vector<1x4x16x8xf32> to vector<4x16x8xf32>
    %cst = arith.constant 0.353553385 : f32
    %5 = vector.broadcast %cst : f32 to vector<4x16x8xf32>
    %6 = arith.mulf %4, %5 : vector<4x16x8xf32>
    %c0_4 = arith.constant 0 : index
    %c0_5 = arith.constant 0 : index
    %c0_6 = arith.constant 0 : index
    %c0_7 = arith.constant 0 : index
    %7 = vector.load %arg4[%c0_4, %c0_5, %c0_6, %c0_7] : memref<1x4x16x8xf32, #tpu.memory_space<vmem>>, vector<1x4x16x8xf32>
    %8 = vector.shape_cast %7 : vector<1x4x16x8xf32> to vector<4x16x8xf32>
    "tpu.trace_start"() <{level = 10 : i32, message = "hqd,hkd->hqk"}> : () -> ()
    %cst_8 = arith.constant dense<0.000000e+00> : vector<4x16x16xf32>
    %9 = tpu.matmul %6, %8, %cst_8 {dimension_numbers = #tpu.dot_dimension_numbers<[2], [2], [1], [1], [0, 0, 0, 1, 1, 1], [0], [0]>} : vector<4x16x8xf32>, vector<4x16x8xf32>, vector<4x16x16xf32> -> vector<4x16x16xf32>
    "tpu.trace_stop"() : () -> ()
    %c0_9 = arith.constant 0 : index
    %c0_10 = arith.constant 0 : index
    %c0_11 = arith.constant 0 : index
    %10 = vector.load %arg7[%c0_9, %c0_10, %c0_11] : memref<4x16x1xf32, #tpu.memory_space<vmem>>, vector<4x16x1xf32>
    %cst_12 = arith.constant dense<0xFF800000> : vector<4x16xf32>
    %11 = vector.multi_reduction <maximumf>, %9, %cst_12 [2] : vector<4x16x16xf32> to vector<4x16xf32>
    %12 = vector.shape_cast %11 : vector<4x16xf32> to vector<4x16x1xf32>
    %13 = arith.maximumf %10, %12 : vector<4x16x1xf32>
    %14 = arith.subf %10, %13 : vector<4x16x1xf32>
    %15 = math.exp %14 : vector<4x16x1xf32>
    %16 = vector.broadcast %13 : vector<4x16x1xf32> to vector<4x16x16xf32>
    %17 = arith.subf %9, %16 : vector<4x16x16xf32>
    %18 = math.exp %17 : vector<4x16x16xf32>
    %c0_13 = arith.constant 0 : index
    %c0_14 = arith.constant 0 : index
    %c0_15 = arith.constant 0 : index
    %19 = vector.load %arg8[%c0_13, %c0_14, %c0_15] : memref<4x16x1xf32, #tpu.memory_space<vmem>>, vector<4x16x1xf32>
    %20 = arith.mulf %15, %19 : vector<4x16x1xf32>
    %cst_16 = arith.constant dense<0.000000e+00> : vector<4x16xf32>
    %21 = vector.multi_reduction <add>, %18, %cst_16 [2] : vector<4x16x16xf32> to vector<4x16xf32>
    %22 = vector.shape_cast %21 : vector<4x16xf32> to vector<4x16x1xf32>
    %23 = arith.addf %20, %22 : vector<4x16x1xf32>
    %c0_17 = arith.constant 0 : index
    %c0_18 = arith.constant 0 : index
    %c0_19 = arith.constant 0 : index
    %24 = vector.load %arg8[%c0_17, %c0_18, %c0_19] : memref<4x16x1xf32, #tpu.memory_space<vmem>>, vector<4x16x1xf32>
    tpu.vector_store %arg8[%c0_17, %c0_18, %c0_19], %23 {strides = array<i32>} : memref<4x16x1xf32, #tpu.memory_space<vmem>>, vector<4x16x1xf32>,
    %c0_20 = arith.constant 0 : index
    %c0_21 = arith.constant 0 : index
    %c0_22 = arith.constant 0 : index
    %25 = vector.load %arg9[%c0_20, %c0_21, %c0_22] : memref<4x16x8xf32, #tpu.memory_space<vmem>>, vector<4x16x8xf32>
    %26 = vector.broadcast %15 : vector<4x16x1xf32> to vector<4x16x8xf32>
    %27 = arith.mulf %26, %25 : vector<4x16x8xf32>
    %c0_23 = arith.constant 0 : index
    %c0_24 = arith.constant 0 : index
    %c0_25 = arith.constant 0 : index
    %c0_26 = arith.constant 0 : index
    %28 = vector.load %arg5[%c0_23, %c0_24, %c0_25, %c0_26] : memref<1x4x16x8xf32, #tpu.memory_space<vmem>>, vector<1x4x16x8xf32>
    %29 = vector.shape_cast %28 : vector<1x4x16x8xf32> to vector<4x16x8xf32>
    "tpu.trace_start"() <{level = 10 : i32, message = "hqk,hkd->hqd"}> : () -> ()
    %cst_27 = arith.constant dense<0.000000e+00> : vector<4x16x8xf32>
    %30 = tpu.matmul %18, %29, %cst_27 {dimension_numbers = #tpu.dot_dimension_numbers<[2], [1], [1], [2], [0, 0, 0, 1, 1, 2], [0], [0]>} : vector<4x16x16xf32>, vector<4x16x8xf32>, vector<4x16x8xf32> -> vector<4x16x8xf32>
    "tpu.trace_stop"() : () -> ()
    %31 = arith.addf %27, %30 : vector<4x16x8xf32>
    %c0_28 = arith.constant 0 : index
    %c0_29 = arith.constant 0 : index
    %c0_30 = arith.constant 0 : index
    %32 = vector.load %arg9[%c0_28, %c0_29, %c0_30] : memref<4x16x8xf32, #tpu.memory_space<vmem>>, vector<4x16x8xf32>
    tpu.vector_store %arg9[%c0_28, %c0_29, %c0_30], %31 {strides = array<i32>} : memref<4x16x8xf32, #tpu.memory_space<vmem>>, vector<4x16x8xf32>,
    %c0_31 = arith.constant 0 : index
    %c0_32 = arith.constant 0 : index
    %c0_33 = arith.constant 0 : index
    %33 = vector.load %arg7[%c0_31, %c0_32, %c0_33] : memref<4x16x1xf32, #tpu.memory_space<vmem>>, vector<4x16x1xf32>
    tpu.vector_store %arg7[%c0_31, %c0_32, %c0_33], %13 {strides = array<i32>} : memref<4x16x1xf32, #tpu.memory_space<vmem>>, vector<4x16x1xf32>,
    %c0_i32_34 = arith.constant 0 : i32
    %34 = arith.cmpi eq, %arg2, %c0_i32_34 : i32
    %35 = arith.extui %34 : i1 to i32
    %c0_i32_35 = arith.constant 0 : i32
    %36 = arith.cmpi ne, %35, %c0_i32_35 : i32
    scf.if %36 {
      %c0_36 = arith.constant 0 : index
      %c0_37 = arith.constant 0 : index
      %c0_38 = arith.constant 0 : index
      %37 = vector.load %arg9[%c0_36, %c0_37, %c0_38] : memref<4x16x8xf32, #tpu.memory_space<vmem>>, vector<4x16x8xf32>
      %c0_39 = arith.constant 0 : index
      %c0_40 = arith.constant 0 : index
      %c0_41 = arith.constant 0 : index
      %38 = vector.load %arg8[%c0_39, %c0_40, %c0_41] : memref<4x16x1xf32, #tpu.memory_space<vmem>>, vector<4x16x1xf32>
      %39 = tpu.reciprocal %38 {approx = true} : vector<4x16x1xf32> -> vector<4x16x1xf32>
      %40 = vector.broadcast %39 : vector<4x16x1xf32> to vector<4x16x8xf32>
      %41 = arith.mulf %37, %40 : vector<4x16x8xf32>
      %42 = vector.extract_strided_slice %41 {offsets = [0, 0, 0], sizes = [1, 16, 8], strides = [1, 1, 1]} : vector<4x16x8xf32> to vector<1x16x8xf32>
      %43 = vector.shape_cast %42 : vector<1x16x8xf32> to vector<16x8xf32>
      %44 = vector.extract_strided_slice %41 {offsets = [1, 0, 0], sizes = [1, 16, 8], strides = [1, 1, 1]} : vector<4x16x8xf32> to vector<1x16x8xf32>
      %45 = vector.shape_cast %44 : vector<1x16x8xf32> to vector<16x8xf32>
      %46 = vector.extract_strided_slice %41 {offsets = [2, 0, 0], sizes = [1, 16, 8], strides = [1, 1, 1]} : vector<4x16x8xf32> to vector<1x16x8xf32>
      %47 = vector.shape_cast %46 : vector<1x16x8xf32> to vector<16x8xf32>
      %48 = vector.extract_strided_slice %41 {offsets = [3, 0, 0], sizes = [1, 16, 8], strides = [1, 1, 1]} : vector<4x16x8xf32> to vector<1x16x8xf32>
      %49 = vector.shape_cast %48 : vector<1x16x8xf32> to vector<16x8xf32>
      %50 = tpu.concatenate %43, %45, %47, %49 in 1 : vector<16x8xf32>, vector<16x8xf32>, vector<16x8xf32>, vector<16x8xf32> -> vector<16x32xf32>
      %c0_42 = arith.constant 0 : index
      %c0_43 = arith.constant 0 : index
      %c0_44 = arith.constant 0 : index
      %51 = vector.load %arg6[%c0_42, %c0_43, %c0_44] : memref<1x16x32xf32, #tpu.memory_space<vmem>>, vector<1x16x32xf32>
      %52 = vector.shape_cast %51 : vector<1x16x32xf32> to vector<16x32xf32>
      %53 = vector.shape_cast %50 : vector<16x32xf32> to vector<1x16x32xf32>
      tpu.vector_store %arg6[%c0_42, %c0_43, %c0_44], %53 {strides = array<i32>} : memref<1x16x32xf32, #tpu.memory_space<vmem>>, vector<1x16x32xf32>,
    } else {
    }
    return
  }
  func.func @transform_0(%arg0: i32, %arg1: i32, %arg2: i32) -> (i32, i32, i32, i32) {
    %c0_i32 = arith.constant 0 : i32
    %c0_i32_0 = arith.constant 0 : i32
    %c0_i32_1 = arith.constant 0 : i32
    return %arg0, %c0_i32, %arg1, %c0_i32_0 : i32, i32, i32, i32
  }
  func.func @transform_1(%arg0: i32, %arg1: i32, %arg2: i32) -> (i32, i32, i32, i32) {
    %c0_i32 = arith.constant 0 : i32
    %c0_i32_0 = arith.constant 0 : i32
    %c0_i32_1 = arith.constant 0 : i32
    return %arg0, %c0_i32, %arg2, %c0_i32_0 : i32, i32, i32, i32
  }
  func.func @transform_2(%arg0: i32, %arg1: i32, %arg2: i32) -> (i32, i32, i32, i32) {
    %c0_i32 = arith.constant 0 : i32
    %c0_i32_0 = arith.constant 0 : i32
    %c0_i32_1 = arith.constant 0 : i32
    return %arg0, %c0_i32, %arg2, %c0_i32_0 : i32, i32, i32, i32
  }
  func.func @transform_3(%arg0: i32, %arg1: i32, %arg2: i32) -> (i32, i32, i32) {
    %c0_i32 = arith.constant 0 : i32
    %c0_i32_0 = arith.constant 0 : i32
    return %arg0, %arg1, %c0_i32 : i32, i32, i32
  }
}

</mosaic_0001>

<llo_original>
// kernel: tpu_custom_call.1
$region0: #{tpu_custom_call.1}
  #allocation0 [shape = 'u32[]', space=smem, size = 0x4, offset = 0x4, fixed_abs, tag = 'smem constant byte address 0x4 - core index']
  #allocation1 [shape = 'u32[144,128]{1,0:T(1,128)}', space=vmem, size = 0x12000, scoped, tag = 'internal scratch']
  #allocation2 [shape = 'f32[4,16,1]{2,1,0:T(8,128)}', space=vmem, size = 0x8000, scoped, tag = 'scratch operand']
  #allocation3 [shape = 'f32[4,16,1]{2,1,0:T(8,128)}', space=vmem, size = 0x8000, scoped, tag = 'scratch operand']
  #allocation4 [shape = 'f32[4,16,8]{2,1,0:T(8,128)}', space=vmem, size = 0x8000, scoped, tag = 'scratch operand']
  %s0 = inlined_call_operand.vmem [shape: f32[2,4,16,8], index: 0, kind: input, shape index: {}]
  %s1 = inlined_call_operand.vmem [shape: f32[2,4,16,8], index: 1, kind: input, shape index: {}]
  %s2 = inlined_call_operand.vmem [shape: f32[2,4,16,8], index: 2, kind: input, shape index: {}]
  %s3 = inlined_call_operand.hbm [shape: f32[2,16,32], index: 3, kind: output, shape index: {}]
  %s4 = sld [smem:[#allocation0]]
  $region53: #{tpu_custom_call.1} parent=0
    _
  %s6 = ssub.s32 1, %s4
  %s7 = scalar_select 0, %s6, %s4
  $region1: #{tpu_custom_call.1} parent=0
    #allocation5 [shape = 'u8[16384]{0}', space=vmem, size = 0x4000, scoped, tag = 'output window, operand 0']
    #allocation6 [shape = 's32[2]{0}', space=sflag, size = 0x8, scoped, tag = 'scoped memory for tpu_custom_call.1']
    %8 = vsyncpa [#allocation6], 0
    %s9 = scalar_lea.sflag [#allocation6], 1
    %10 = vsyncpa %s9, 0
    loop: start=0, step=1, limit=4
    $region2: #{tpu_custom_call.1} parent=1 // loop_pre_header
      _
    $region3: #{tpu_custom_call.1} parent=1 // loop_header
      %s12 = sphi 0, %s16
      %p13 = scmp.ge.s32.totalorder %s12, 4
      %s19 = sphi 0, %s38
      %s20 = sphi 0, %s34
      %s21 = sphi 0, %s30
      %s22 = sphi 0, %s19
      %s23 = sphi 0, %s20
      %s24 = sphi 0, %s21
      %s25 = sphi 0, %s22
      %s26 = sphi 0, %s23
      %s27 = sphi 0, %s24
      %s43 = sphi 0, %s45
      %s46 = sphi 0, %s43
      %s47 = sphi 0, %s46
      %s63 = sphi 0, %s47
      %s71 = sphi 0, %s73
      %s74 = sphi 0, %s71
      %s75 = sphi 0, %s74
      %s91 = sphi 0, %s75
      %s99 = sphi 0, %s101
      %s102 = sphi 0, %s99
      %s103 = sphi 0, %s102
      %s119 = sphi 0, %s103
      %s127 = sphi 0, %s129
      %s130 = sphi 0, %s127
      %s131 = sphi 0, %s130
      %s147 = sphi 0, %s131
    $region4: #{tpu_custom_call.1} parent=1 // loop_header_branch
      %15 = sbr.rel (%p13) target = $region8
    $region5: #{tpu_custom_call.1} parent=1 // loop_body
      %s17 = ssub.s32 %s12, 1
      %s18 = ssub.s32 %s12, 2
      %s28 = sadd.s32 1, %s21
      %p29 = scmp.ge.s32.totalorder %s28, 1
      %s30 = scalar_select %p29, 0, %s28
      %s31 = sadd.s32 1, %s20
      %s32 = scalar_select %p29, %s31, %s20
      %p33 = scmp.ge.s32.totalorder %s32, 1
      %s34 = scalar_select %p33, 0, %s32
      %s35 = sadd.s32 1, %s19
      %s36 = scalar_select %p33, %s35, %s19
      %p37 = scmp.ge.s32.totalorder %s36, 2
      %s38 = scalar_select %p37, 0, %s36
      %s39 = ssub.s32 %s19, %s38
      %s40 = ssub.s32 %s20, %s34
      %s41 = sor.u32 %s39, %s40
      %p42 = scmp.eq.s32.totalorder %s41, 0
      %s44 = sadd.s32 %s43, 1
      %s45 = scalar_select %p42, %s43, %s44
      %p48 = pneg %p42
      %p49 = scmp.eq.s32.totalorder %s12, 1
      %p50 = por %p48, %p49
      %p51 = scmp.ne.s32.totalorder %s43, %s46
      %p52 = scmp.eq.s32.totalorder %s12, 0
      %p53 = por %p51, %p52
      %p54 = scmp.ne.s32.totalorder %s43, %s46
      %p55 = scmp.eq.s32.totalorder %s17, 1
      %p56 = por %p54, %p55
      %p57 = scmp.ne.s32.totalorder %s46, %s47
      %p58 = scmp.eq.s32.totalorder %s17, 0
      %p59 = por %p57, %p58
      %p60 = scmp.ne.s32.totalorder %s46, %s47
      %p61 = scmp.eq.s32.totalorder %s18, 1
      %p62 = por %p60, %p61
      %p64 = scmp.ne.s32.totalorder %s47, %s63
      %p65 = scmp.eq.s32.totalorder %s18, 0
      %p66 = por %p64, %p65
      %s67 = ssub.s32 %s19, %s38
      %s68 = ssub.s32 %s21, %s30
      %s69 = sor.u32 %s67, %s68
      %p70 = scmp.eq.s32.totalorder %s69, 0
      %s72 = sadd.s32 %s71, 1
      %s73 = scalar_select %p70, %s71, %s72
      %p76 = pneg %p70
      %p77 = scmp.eq.s32.totalorder %s12, 1
      %p78 = por %p76, %p77
      %p79 = scmp.ne.s32.totalorder %s71, %s74
      %p80 = scmp.eq.s32.totalorder %s12, 0
      %p81 = por %p79, %p80
      %p82 = scmp.ne.s32.totalorder %s71, %s74
      %p83 = scmp.eq.s32.totalorder %s17, 1
      %p84 = por %p82, %p83
      %p85 = scmp.ne.s32.totalorder %s74, %s75
      %p86 = scmp.eq.s32.totalorder %s17, 0
      %p87 = por %p85, %p86
      %p88 = scmp.ne.s32.totalorder %s74, %s75
      %p89 = scmp.eq.s32.totalorder %s18, 1
      %p90 = por %p88, %p89
      %p92 = scmp.ne.s32.totalorder %s75, %s91
      %p93 = scmp.eq.s32.totalorder %s18, 0
      %p94 = por %p92, %p93
      %s95 = ssub.s32 %s19, %s38
      %s96 = ssub.s32 %s21, %s30
      %s97 = sor.u32 %s95, %s96
      %p98 = scmp.eq.s32.totalorder %s97, 0
      %s100 = sadd.s32 %s99, 1
      %s101 = scalar_select %p98, %s99, %s100
      %p104 = pneg %p98
      %p105 = scmp.eq.s32.totalorder %s12, 1
      %p106 = por %p104, %p105
      %p107 = scmp.ne.s32.totalorder %s99, %s102
      %p108 = scmp.eq.s32.totalorder %s12, 0
      %p109 = por %p107, %p108
      %p110 = scmp.ne.s32.totalorder %s99, %s102
      %p111 = scmp.eq.s32.totalorder %s17, 1
      %p112 = por %p110, %p111
      %p113 = scmp.ne.s32.totalorder %s102, %s103
      %p114 = scmp.eq.s32.totalorder %s17, 0
      %p115 = por %p113, %p114
      %p116 = scmp.ne.s32.totalorder %s102, %s103
      %p117 = scmp.eq.s32.totalorder %s18, 1
      %p118 = por %p116, %p117
      %p120 = scmp.ne.s32.totalorder %s103, %s119
      %p121 = scmp.eq.s32.totalorder %s18, 0
      %p122 = por %p120, %p121
      %s123 = ssub.s32 %s19, %s38
      %s124 = ssub.s32 %s20, %s34
      %s125 = sor.u32 %s123, %s124
      %p126 = scmp.eq.s32.totalorder %s125, 0
      %s128 = sadd.s32 %s127, 1
      %s129 = scalar_select %p126, %s127, %s128
      %p132 = pneg %p126
      %p133 = scmp.eq.s32.totalorder %s12, 1
      %p134 = por %p132, %p133
      %p135 = scmp.ne.s32.totalorder %s127, %s130
      %p136 = scmp.eq.s32.totalorder %s12, 0
      %p137 = por %p135, %p136
      %p138 = scmp.ne.s32.totalorder %s127, %s130
      %p139 = scmp.eq.s32.totalorder %s17, 1
      %p140 = por %p138, %p139
      %p141 = scmp.ne.s32.totalorder %s130, %s131
      %p142 = scmp.eq.s32.totalorder %s17, 0
      %p143 = por %p141, %p142
      %p144 = scmp.ne.s32.totalorder %s130, %s131
      %p145 = scmp.eq.s32.totalorder %s18, 1
      %p146 = por %p144, %p145
      %p148 = scmp.ne.s32.totalorder %s131, %s147
      %p149 = scmp.eq.s32.totalorder %s18, 0
      %p150 = por %p148, %p149
      %p151 = scmp.le.s32.totalorder 1, %s12
      %p152 = scmp.lt.s32.totalorder %s12, 3
      %p153 = pnand %p151, %p152
      %p154 = pneg %p153
      // Predicated region
      $region9: #{tpu_custom_call.1} parent=5 // pred_check
        _
      $region10: #{tpu_custom_call.1} parent=5 // pred_check_branch
        %156 = sbr.rel (%p153) target = $region12
      $region11: #{tpu_custom_call.1} parent=5 // pred_region
        %s157 = ssub.s32 %s12, 1
      $region12: #{tpu_custom_call.1} parent=5 // pred_fallthru
        _
      %p158 = scmp.lt.s32.totalorder %s12, 2
      // Predicated region
      $region13: #{tpu_custom_call.1} parent=5 // pred_check
        %p159 = pneg %p158
      $region14: #{tpu_custom_call.1} parent=5 // pred_check_branch
        %161 = sbr.rel (%p159) target = $region16
      $region15: #{tpu_custom_call.1} parent=5 // pred_region
        // Predicated region
        $region17: #{tpu_custom_call.1} parent=15 // pred_check
          %p162 = pneg %p53
        $region18: #{tpu_custom_call.1} parent=15 // pred_check_branch
          %164 = sbr.rel (%p162) target = $region20
        $region19: #{tpu_custom_call.1} parent=15 // pred_region
          %s165 = smul.u32 2, %s20
          %p166 = scmp.lt.s32.totalorder %s19, 1
          %s167 = scalar_select %p166, %s19, 1
          %p168 = scmp.lt.s32.totalorder %s165, 1
          %s169 = scalar_select %p168, %s165, 1
          %s170 = smul.addr %s167, 8
          %s171 = sadd.s32 %s169, %s170
          %s172 = smul.addr %s171, 8
          %s173 = scalar_lea.vmem %s0, %s172
          %s174 = smul.u32 2, %s20
        $region20: #{tpu_custom_call.1} parent=15 // pred_fallthru
          _
        // Predicated region
        $region21: #{tpu_custom_call.1} parent=15 // pred_check
          %p175 = pneg %p81
        $region22: #{tpu_custom_call.1} parent=15 // pred_check_branch
          %177 = sbr.rel (%p175) target = $region24
        $region23: #{tpu_custom_call.1} parent=15 // pred_region
          %s178 = smul.u32 2, %s21
          %p179 = scmp.lt.s32.totalorder %s19, 1
          %s180 = scalar_select %p179, %s19, 1
          %p181 = scmp.lt.s32.totalorder %s178, 1
          %s182 = scalar_select %p181, %s178, 1
          %s183 = smul.addr %s180, 8
          %s184 = sadd.s32 %s182, %s183
          %s185 = smul.addr %s184, 8
          %s186 = scalar_lea.vmem %s1, %s185
          %s187 = smul.u32 2, %s21
        $region24: #{tpu_custom_call.1} parent=15 // pred_fallthru
          _
        // Predicated region
        $region25: #{tpu_custom_call.1} parent=15 // pred_check
          %p188 = pneg %p109
        $region26: #{tpu_custom_call.1} parent=15 // pred_check_branch
          %190 = sbr.rel (%p188) target = $region28
        $region27: #{tpu_custom_call.1} parent=15 // pred_region
          %s191 = smul.u32 2, %s21
          %p192 = scmp.lt.s32.totalorder %s19, 1
          %s193 = scalar_select %p192, %s19, 1
          %p194 = scmp.lt.s32.totalorder %s191, 1
          %s195 = scalar_select %p194, %s191, 1
          %s196 = smul.addr %s193, 8
          %s197 = sadd.s32 %s195, %s196
          %s198 = smul.addr %s197, 8
          %s199 = scalar_lea.vmem %s2, %s198
          %s200 = smul.u32 2, %s21
        $region28: #{tpu_custom_call.1} parent=15 // pred_fallthru
          _
      $region16: #{tpu_custom_call.1} parent=5 // pred_fallthru
        _
      %p201 = scmp.le.s32.totalorder 1, %s12
      %p202 = scmp.lt.s32.totalorder %s12, 3
      %p203 = pnand %p201, %p202
      %p204 = pneg %p203
      // Predicated region
      $region29: #{tpu_custom_call.1} parent=5 // pred_check
        _
      $region30: #{tpu_custom_call.1} parent=5 // pred_check_branch
        %206 = sbr.rel (%p203) target = $region32
      $region31: #{tpu_custom_call.1} parent=5 // pred_region
        %s207 = ssub.s32 %s12, 1
        %s208 = smul.u32 2, %s23
        %p209 = scmp.lt.s32.totalorder %s22, 1
        %s210 = scalar_select %p209, %s22, 1
        %p211 = scmp.lt.s32.totalorder %s208, 1
        %s212 = scalar_select %p211, %s208, 1
        %s213 = smul.addr %s210, 8
        %s214 = sadd.s32 %s212, %s213
        %s215 = smul.addr %s214, 8
        %s216 = scalar_lea.vmem %s0, %s215
        %p217 = pneg %p59
        %p218 = pneg %p56
        %s219 = smul.u32 2, %s24
        %p220 = scmp.lt.s32.totalorder %s22, 1
        %s221 = scalar_select %p220, %s22, 1
        %p222 = scmp.lt.s32.totalorder %s219, 1
        %s223 = scalar_select %p222, %s219, 1
        %s224 = smul.addr %s221, 8
        %s225 = sadd.s32 %s223, %s224
        %s226 = smul.addr %s225, 8
        %s227 = scalar_lea.vmem %s1, %s226
        %p228 = pneg %p87
        %p229 = pneg %p84
        %s230 = smul.u32 2, %s24
        %p231 = scmp.lt.s32.totalorder %s22, 1
        %s232 = scalar_select %p231, %s22, 1
        %p233 = scmp.lt.s32.totalorder %s230, 1
        %s234 = scalar_select %p233, %s230, 1
        %s235 = smul.addr %s232, 8
        %s236 = sadd.s32 %s234, %s235
        %s237 = smul.addr %s236, 8
        %s238 = scalar_lea.vmem %s2, %s237
        %p239 = pneg %p115
        %p240 = pneg %p112
        %p241 = pneg %p143
        %p242 = pneg %p140
        %s243 = sand.u32 %s130, 1
        %s244 = scalar_lea.sflag [#allocation6], %s243
        %s245 = sand.u32 %s130, 1
        %s246 = smul.addr %s245, 16
        %s247 = scalar_lea.vmem [#allocation5], %s246
        %s248 = smul.u32 2, %s23
        %p249 = scmp.lt.s32.totalorder %s22, 1
        %s250 = scalar_select %p249, %s22, 1
        %p251 = scmp.lt.s32.totalorder %s248, 1
        %s252 = scalar_select %p251, %s248, 1
        %s253 = smul.addr %s250, 8
        %s254 = sadd.s32 %s252, %s253
        %s255 = smul.addr %s254, 8
        %s256 = scalar_lea.vmem %s0, %s255
        %s257 = smul.u32 2, %s23
        %s258 = smul.u32 2, %s24
        %p259 = scmp.lt.s32.totalorder %s22, 1
        %s260 = scalar_select %p259, %s22, 1
        %p261 = scmp.lt.s32.totalorder %s258, 1
        %s262 = scalar_select %p261, %s258, 1
        %s263 = smul.addr %s260, 8
        %s264 = sadd.s32 %s262, %s263
        %s265 = smul.addr %s264, 8
        %s266 = scalar_lea.vmem %s1, %s265
        %s267 = smul.u32 2, %s24
        %s268 = smul.u32 2, %s24
        %p269 = scmp.lt.s32.totalorder %s22, 1
        %s270 = scalar_select %p269, %s22, 1
        %p271 = scmp.lt.s32.totalorder %s268, 1
        %s272 = scalar_select %p271, %s268, 1
        %s273 = smul.addr %s270, 8
        %s274 = sadd.s32 %s272, %s273
        %s275 = smul.addr %s274, 8
        %s276 = scalar_lea.vmem %s2, %s275
        %s277 = smul.u32 2, %s24
        %s278 = smul.u32 2, %s23
        %p279 = scmp.eq.s32.totalorder %s24, 0
        // Predicated region
        $region33: #{tpu_custom_call.1} parent=31 // pred_check
          %p280 = pneg %p279
        $region34: #{tpu_custom_call.1} parent=31 // pred_check_branch
          %282 = sbr.rel (%p280) target = $region36
        $region35: #{tpu_custom_call.1} parent=31 // pred_region
          %vm283 = vcmask 7168
          %284 = vst.msk [vmem:[#allocation2] sm:$0xff] %vm283, -inf
          %285 = vst.msk [vmem:[#allocation2 + $0x8] sm:$0xff] %vm283, -inf
          %286 = vst.msk [vmem:[#allocation2 + $0x10] sm:$0xff] %vm283, -inf
          %287 = vst.msk [vmem:[#allocation2 + $0x18] sm:$0xff] %vm283, -inf
          %288 = vst.msk [vmem:[#allocation2 + $0x20] sm:$0xff] %vm283, -inf
          %289 = vst.msk [vmem:[#allocation2 + $0x28] sm:$0xff] %vm283, -inf
          %290 = vst.msk [vmem:[#allocation2 + $0x30] sm:$0xff] %vm283, -inf
          %291 = vst.msk [vmem:[#allocation2 + $0x38] sm:$0xff] %vm283, -inf
          %292 = vst.msk [vmem:[#allocation3] sm:$0xff] %vm283, 0.0
          %293 = vst.msk [vmem:[#allocation3 + $0x8] sm:$0xff] %vm283, 0.0
          %294 = vst.msk [vmem:[#allocation3 + $0x10] sm:$0xff] %vm283, 0.0
          %295 = vst.msk [vmem:[#allocation3 + $0x18] sm:$0xff] %vm283, 0.0
          %296 = vst.msk [vmem:[#allocation3 + $0x20] sm:$0xff] %vm283, 0.0
          %297 = vst.msk [vmem:[#allocation3 + $0x28] sm:$0xff] %vm283, 0.0
          %298 = vst.msk [vmem:[#allocation3 + $0x30] sm:$0xff] %vm283, 0.0
          %299 = vst.msk [vmem:[#allocation3 + $0x38] sm:$0xff] %vm283, 0.0
          %vm300 = vcmask 64512
          %301 = vst.msk [vmem:[#allocation4] sm:$0xff] %vm300, 0.0
          %302 = vst.msk [vmem:[#allocation4 + $0x8] sm:$0xff] %vm300, 0.0
          %303 = vst.msk [vmem:[#allocation4 + $0x10] sm:$0xff] %vm300, 0.0
          %304 = vst.msk [vmem:[#allocation4 + $0x18] sm:$0xff] %vm300, 0.0
          %305 = vst.msk [vmem:[#allocation4 + $0x20] sm:$0xff] %vm300, 0.0
          %306 = vst.msk [vmem:[#allocation4 + $0x28] sm:$0xff] %vm300, 0.0
          %307 = vst.msk [vmem:[#allocation4 + $0x30] sm:$0xff] %vm300, 0.0
          %308 = vst.msk [vmem:[#allocation4 + $0x38] sm:$0xff] %vm300, 0.0
        $region36: #{tpu_custom_call.1} parent=31 // pred_fallthru
          _
        %v309 = vld [vmem:[%s256] sm:$0xff]
        %v310 = vld [vmem:[%s256 + $0x8] sm:$0xff]
        %v311 = vld [vmem:[%s256 + $0x10] sm:$0xff]
        %v312 = vld [vmem:[%s256 + $0x18] sm:$0xff]
        %v313 = vld [vmem:[%s256 + $0x20] sm:$0xff]
        %v314 = vld [vmem:[%s256 + $0x28] sm:$0xff]
        %v315 = vld [vmem:[%s256 + $0x30] sm:$0xff]
        %v316 = vld [vmem:[%s256 + $0x38] sm:$0xff]
        %v317 = vmul.f32 %v309, 0.35355338
        %v318 = vmul.f32 %v310, 0.35355338
        %v319 = vmul.f32 %v311, 0.35355338
        %v320 = vmul.f32 %v312, 0.35355338
        %v321 = vmul.f32 %v313, 0.35355338
        %v322 = vmul.f32 %v314, 0.35355338
        %v323 = vmul.f32 %v315, 0.35355338
        %v324 = vmul.f32 %v316, 0.35355338
        %v325 = vld [vmem:[%s266] sm:$0xff]
        %v326 = vld [vmem:[%s266 + $0x8] sm:$0xff]
        %v327 = vld [vmem:[%s266 + $0x10] sm:$0xff]
        %v328 = vld [vmem:[%s266 + $0x18] sm:$0xff]
        %v329 = vld [vmem:[%s266 + $0x20] sm:$0xff]
        %v330 = vld [vmem:[%s266 + $0x28] sm:$0xff]
        %v331 = vld [vmem:[%s266 + $0x30] sm:$0xff]
        %v332 = vld [vmem:[%s266 + $0x38] sm:$0xff]
        %vm333 = vcmask 64512
        %v335 = vsel %vm333, %v317, 0
        %v338 = vsel %vm333, %v318, 0
        %v341 = vsel %vm333, %v325, 0
        %v344 = vsel %vm333, %v326, 0
        %346 = vmatprep.subr.mxu0 0.0
        %347 = vmatpush1.xpose.msra.mxu0 %v341
        %348 = vmatprep.subr.mxu0 0.0
        %349 = vmatpush1.xpose.msra.mxu0 %v344
        %350 = vmatprep.subr.mxu0 0.0
        %351 = vmatpush1.xpose.msra.mxu0 0.0
        %352 = vmatprep.subr.mxu0 0.0
        %353 = vmatpush1.xpose.msra.mxu0 0.0
        %354 = vmatprep.subr.mxu0 0.0
        %355 = vmatpush1.xpose.msra.mxu0 0.0
        %356 = vmatprep.subr.mxu0 0.0
        %357 = vmatpush1.xpose.msra.mxu0 0.0
        %358 = vmatprep.subr.mxu0 0.0
        %359 = vmatpush1.xpose.msra.mxu0 0.0
        %360 = vmatprep.subr.mxu0 0.0
        %361 = vmatpush1.xpose.msra.mxu0 0.0
        %362 = vmatprep.subr.mxu0 0.0
        %363 = vmatpush1.xpose.msra.mxu0 0.0
        %364 = vmatprep.subr.mxu0 0.0
        %365 = vmatpush1.xpose.msra.mxu0 0.0
        %366 = vmatprep.subr.mxu0 0.0
        %367 = vmatpush1.xpose.msra.mxu0 0.0
        %368 = vmatprep.subr.mxu0 0.0
        %369 = vmatpush1.xpose.msra.mxu0 0.0
        %370 = vmatprep.subr.mxu0 0.0
        %371 = vmatpush1.xpose.msra.mxu0 0.0
        %372 = vmatprep.subr.mxu0 0.0
        %373 = vmatpush1.xpose.msra.mxu0 0.0
        %374 = vmatprep.subr.mxu0 0.0
        %375 = vmatpush1.xpose.msra.mxu0 0.0
        %376 = vmatprep.subr.mxu0 0.0
        %377 = vmatpush1.xpose.msra.mxu0 0.0
        %378 = vmatprep.subr.mxu0 0.0
        %379 = vmatpush1.xpose.msra.mxu0 0.0
        %380 = vmatprep.subr.mxu0 0.0
        %381 = vmatpush1.xpose.msra.mxu0 0.0
        %382 = vmatprep.subr.mxu0 0.0
        %383 = vmatpush1.xpose.msra.mxu0 0.0
        %384 = vmatprep.subr.mxu0 0.0
        %385 = vmatpush1.xpose.msra.mxu0 0.0
        %386 = vmatprep.subr.mxu0 0.0
        %387 = vmatpush1.xpose.msra.mxu0 0.0
        %388 = vmatprep.subr.mxu0 0.0
        %389 = vmatpush1.xpose.msra.mxu0 0.0
        %390 = vmatprep.subr.mxu0 0.0
        %391 = vmatpush1.xpose.msra.mxu0 0.0
        %392 = vmatprep.subr.mxu0 0.0
        %393 = vmatpush1.xpose.msra.mxu0 0.0
        %394 = vmatprep.subr.mxu0 0.0
        %395 = vmatpush1.xpose.msra.mxu0 0.0
        %396 = vmatprep.subr.mxu0 0.0
        %397 = vmatpush1.xpose.msra.mxu0 0.0
        %398 = vmatprep.subr.mxu0 0.0
        %399 = vmatpush1.xpose.msra.mxu0 0.0
        %400 = vmatprep.subr.mxu0 0.0
        %401 = vmatpush1.xpose.msra.mxu0 0.0
        %402 = vmatprep.subr.mxu0 0.0
        %403 = vmatpush1.xpose.msra.mxu0 0.0
        %404 = vmatprep.subr.mxu0 0.0
        %405 = vmatpush1.xpose.msra.mxu0 0.0
        %406 = vmatprep.subr.mxu0 0.0
        %407 = vmatpush1.xpose.msra.mxu0 0.0
        %408 = vmatprep.subr.mxu0 0.0
        %409 = vmatpush1.xpose.msra.mxu0 0.0
        %410 = vmatprep.mubr.f32.mxu0 0.0
        %411 = vmatmul.mubr.f32.gmra.mrb[0].mxu0 %v335
        %v412 = vpop.f32.mrb[0].mxu0
        %v413 = vadd.f32 0.0, %v412
        %v414 = vpop.f32.mrb[0].mxu0
        %415 = vmatprep.mubr.f32.mxu0 0.0
        %416 = vmatmul.mubr.f32.gmra.mrb[0].mxu0 %v338
        %v417 = vpop.f32.mrb[0].mxu0
        %v418 = vadd.f32 0.0, %v417
        %v419 = vpop.f32.mrb[0].mxu0
        %420 = vdwg.mxu0
        %v422 = vsel %vm333, %v319, 0
        %v425 = vsel %vm333, %v320, 0
        %v428 = vsel %vm333, %v327, 0
        %v431 = vsel %vm333, %v328, 0
        %433 = vmatprep.subr.mxu0 0.0
        %434 = vmatpush1.xpose.msra.mxu0 %v428
        %435 = vmatprep.subr.mxu0 0.0
        %436 = vmatpush1.xpose.msra.mxu0 %v431
        %437 = vmatprep.subr.mxu0 0.0
        %438 = vmatpush1.xpose.msra.mxu0 0.0
        %439 = vmatprep.subr.mxu0 0.0
        %440 = vmatpush1.xpose.msra.mxu0 0.0
        %441 = vmatprep.subr.mxu0 0.0
        %442 = vmatpush1.xpose.msra.mxu0 0.0
        %443 = vmatprep.subr.mxu0 0.0
        %444 = vmatpush1.xpose.msra.mxu0 0.0
        %445 = vmatprep.subr.mxu0 0.0
        %446 = vmatpush1.xpose.msra.mxu0 0.0
        %447 = vmatprep.subr.mxu0 0.0
        %448 = vmatpush1.xpose.msra.mxu0 0.0
        %449 = vmatprep.subr.mxu0 0.0
        %450 = vmatpush1.xpose.msra.mxu0 0.0
        %451 = vmatprep.subr.mxu0 0.0
        %452 = vmatpush1.xpose.msra.mxu0 0.0
        %453 = vmatprep.subr.mxu0 0.0
        %454 = vmatpush1.xpose.msra.mxu0 0.0
        %455 = vmatprep.subr.mxu0 0.0
        %456 = vmatpush1.xpose.msra.mxu0 0.0
        %457 = vmatprep.subr.mxu0 0.0
        %458 = vmatpush1.xpose.msra.mxu0 0.0
        %459 = vmatprep.subr.mxu0 0.0
        %460 = vmatpush1.xpose.msra.mxu0 0.0
        %461 = vmatprep.subr.mxu0 0.0
        %462 = vmatpush1.xpose.msra.mxu0 0.0
        %463 = vmatprep.subr.mxu0 0.0
        %464 = vmatpush1.xpose.msra.mxu0 0.0
        %465 = vmatprep.subr.mxu0 0.0
        %466 = vmatpush1.xpose.msra.mxu0 0.0
        %467 = vmatprep.subr.mxu0 0.0
        %468 = vmatpush1.xpose.msra.mxu0 0.0
        %469 = vmatprep.subr.mxu0 0.0
        %470 = vmatpush1.xpose.msra.mxu0 0.0
        %471 = vmatprep.subr.mxu0 0.0
        %472 = vmatpush1.xpose.msra.mxu0 0.0
        %473 = vmatprep.subr.mxu0 0.0
        %474 = vmatpush1.xpose.msra.mxu0 0.0
        %475 = vmatprep.subr.mxu0 0.0
        %476 = vmatpush1.xpose.msra.mxu0 0.0
        %477 = vmatprep.subr.mxu0 0.0
        %478 = vmatpush1.xpose.msra.mxu0 0.0
        %479 = vmatprep.subr.mxu0 0.0
        %480 = vmatpush1.xpose.msra.mxu0 0.0
        %481 = vmatprep.subr.mxu0 0.0
        %482 = vmatpush1.xpose.msra.mxu0 0.0
        %483 = vmatprep.subr.mxu0 0.0
        %484 = vmatpush1.xpose.msra.mxu0 0.0
        %485 = vmatprep.subr.mxu0 0.0
        %486 = vmatpush1.xpose.msra.mxu0 0.0
        %487 = vmatprep.subr.mxu0 0.0
        %488 = vmatpush1.xpose.msra.mxu0 0.0
        %489 = vmatprep.subr.mxu0 0.0
        %490 = vmatpush1.xpose.msra.mxu0 0.0
        %491 = vmatprep.subr.mxu0 0.0
        %492 = vmatpush1.xpose.msra.mxu0 0.0
        %493 = vmatprep.subr.mxu0 0.0
        %494 = vmatpush1.xpose.msra.mxu0 0.0
        %495 = vmatprep.subr.mxu0 0.0
        %496 = vmatpush1.xpose.msra.mxu0 0.0
        %497 = vmatprep.mubr.f32.mxu0 0.0
        %498 = vmatmul.mubr.f32.gmra.mrb[0].mxu0 %v422
        %v499 = vpop.f32.mrb[0].mxu0
        %v500 = vadd.f32 0.0, %v499
        %v501 = vpop.f32.mrb[0].mxu0
        %502 = vmatprep.mubr.f32.mxu0 0.0
        %503 = vmatmul.mubr.f32.gmra.mrb[0].mxu0 %v425
        %v504 = vpop.f32.mrb[0].mxu0
        %v505 = vadd.f32 0.0, %v504
        %v506 = vpop.f32.mrb[0].mxu0
        %507 = vdwg.mxu0
        %v509 = vsel %vm333, %v321, 0
        %v512 = vsel %vm333, %v322, 0
        %v515 = vsel %vm333, %v329, 0
        %v518 = vsel %vm333, %v330, 0
        %520 = vmatprep.subr.mxu0 0.0
        %521 = vmatpush1.xpose.msra.mxu0 %v515
        %522 = vmatprep.subr.mxu0 0.0
        %523 = vmatpush1.xpose.msra.mxu0 %v518
        %524 = vmatprep.subr.mxu0 0.0
        %525 = vmatpush1.xpose.msra.mxu0 0.0
        %526 = vmatprep.subr.mxu0 0.0
        %527 = vmatpush1.xpose.msra.mxu0 0.0
        %528 = vmatprep.subr.mxu0 0.0
        %529 = vmatpush1.xpose.msra.mxu0 0.0
        %530 = vmatprep.subr.mxu0 0.0
        %531 = vmatpush1.xpose.msra.mxu0 0.0
        %532 = vmatprep.subr.mxu0 0.0
        %533 = vmatpush1.xpose.msra.mxu0 0.0
        %534 = vmatprep.subr.mxu0 0.0
        %535 = vmatpush1.xpose.msra.mxu0 0.0
        %536 = vmatprep.subr.mxu0 0.0
        %537 = vmatpush1.xpose.msra.mxu0 0.0
        %538 = vmatprep.subr.mxu0 0.0
        %539 = vmatpush1.xpose.msra.mxu0 0.0
        %540 = vmatprep.subr.mxu0 0.0
        %541 = vmatpush1.xpose.msra.mxu0 0.0
        %542 = vmatprep.subr.mxu0 0.0
        %543 = vmatpush1.xpose.msra.mxu0 0.0
        %544 = vmatprep.subr.mxu0 0.0
        %545 = vmatpush1.xpose.msra.mxu0 0.0
        %546 = vmatprep.subr.mxu0 0.0
        %547 = vmatpush1.xpose.msra.mxu0 0.0
        %548 = vmatprep.subr.mxu0 0.0
        %549 = vmatpush1.xpose.msra.mxu0 0.0
        %550 = vmatprep.subr.mxu0 0.0
        %551 = vmatpush1.xpose.msra.mxu0 0.0
        %552 = vmatprep.subr.mxu0 0.0
        %553 = vmatpush1.xpose.msra.mxu0 0.0
        %554 = vmatprep.subr.mxu0 0.0
        %555 = vmatpush1.xpose.msra.mxu0 0.0
        %556 = vmatprep.subr.mxu0 0.0
        %557 = vmatpush1.xpose.msra.mxu0 0.0
        %558 = vmatprep.subr.mxu0 0.0
        %559 = vmatpush1.xpose.msra.mxu0 0.0
        %560 = vmatprep.subr.mxu0 0.0
        %561 = vmatpush1.xpose.msra.mxu0 0.0
        %562 = vmatprep.subr.mxu0 0.0
        %563 = vmatpush1.xpose.msra.mxu0 0.0
        %564 = vmatprep.subr.mxu0 0.0
        %565 = vmatpush1.xpose.msra.mxu0 0.0
        %566 = vmatprep.subr.mxu0 0.0
        %567 = vmatpush1.xpose.msra.mxu0 0.0
        %568 = vmatprep.subr.mxu0 0.0
        %569 = vmatpush1.xpose.msra.mxu0 0.0
        %570 = vmatprep.subr.mxu0 0.0
        %571 = vmatpush1.xpose.msra.mxu0 0.0
        %572 = vmatprep.subr.mxu0 0.0
        %573 = vmatpush1.xpose.msra.mxu0 0.0
        %574 = vmatprep.subr.mxu0 0.0
        %575 = vmatpush1.xpose.msra.mxu0 0.0
        %576 = vmatprep.subr.mxu0 0.0
        %577 = vmatpush1.xpose.msra.mxu0 0.0
        %578 = vmatprep.subr.mxu0 0.0
        %579 = vmatpush1.xpose.msra.mxu0 0.0
        %580 = vmatprep.subr.mxu0 0.0
        %581 = vmatpush1.xpose.msra.mxu0 0.0
        %582 = vmatprep.subr.mxu0 0.0
        %583 = vmatpush1.xpose.msra.mxu0 0.0
        %584 = vmatprep.mubr.f32.mxu0 0.0
        %585 = vmatmul.mubr.f32.gmra.mrb[0].mxu0 %v509
        %v586 = vpop.f32.mrb[0].mxu0
        %v587 = vadd.f32 0.0, %v586
        %v588 = vpop.f32.mrb[0].mxu0
        %589 = vmatprep.mubr.f32.mxu0 0.0
        %590 = vmatmul.mubr.f32.gmra.mrb[0].mxu0 %v512
        %v591 = vpop.f32.mrb[0].mxu0
        %v592 = vadd.f32 0.0, %v591
        %v593 = vpop.f32.mrb[0].mxu0
        %594 = vdwg.mxu0
        %v596 = vsel %vm333, %v323, 0
        %v599 = vsel %vm333, %v324, 0
        %v602 = vsel %vm333, %v331, 0
        %v605 = vsel %vm333, %v332, 0
        %607 = vmatprep.subr.mxu0 0.0
        %608 = vmatpush1.xpose.msra.mxu0 %v602
        %609 = vmatprep.subr.mxu0 0.0
        %610 = vmatpush1.xpose.msra.mxu0 %v605
        %611 = vmatprep.subr.mxu0 0.0
        %612 = vmatpush1.xpose.msra.mxu0 0.0
        %613 = vmatprep.subr.mxu0 0.0
        %614 = vmatpush1.xpose.msra.mxu0 0.0
        %615 = vmatprep.subr.mxu0 0.0
        %616 = vmatpush1.xpose.msra.mxu0 0.0
        %617 = vmatprep.subr.mxu0 0.0
        %618 = vmatpush1.xpose.msra.mxu0 0.0
        %619 = vmatprep.subr.mxu0 0.0
        %620 = vmatpush1.xpose.msra.mxu0 0.0
        %621 = vmatprep.subr.mxu0 0.0
        %622 = vmatpush1.xpose.msra.mxu0 0.0
        %623 = vmatprep.subr.mxu0 0.0
        %624 = vmatpush1.xpose.msra.mxu0 0.0
        %625 = vmatprep.subr.mxu0 0.0
        %626 = vmatpush1.xpose.msra.mxu0 0.0
        %627 = vmatprep.subr.mxu0 0.0
        %628 = vmatpush1.xpose.msra.mxu0 0.0
        %629 = vmatprep.subr.mxu0 0.0
        %630 = vmatpush1.xpose.msra.mxu0 0.0
        %631 = vmatprep.subr.mxu0 0.0
        %632 = vmatpush1.xpose.msra.mxu0 0.0
        %633 = vmatprep.subr.mxu0 0.0
        %634 = vmatpush1.xpose.msra.mxu0 0.0
        %635 = vmatprep.subr.mxu0 0.0
        %636 = vmatpush1.xpose.msra.mxu0 0.0
        %637 = vmatprep.subr.mxu0 0.0
        %638 = vmatpush1.xpose.msra.mxu0 0.0
        %639 = vmatprep.subr.mxu0 0.0
        %640 = vmatpush1.xpose.msra.mxu0 0.0
        %641 = vmatprep.subr.mxu0 0.0
        %642 = vmatpush1.xpose.msra.mxu0 0.0
        %643 = vmatprep.subr.mxu0 0.0
        %644 = vmatpush1.xpose.msra.mxu0 0.0
        %645 = vmatprep.subr.mxu0 0.0
        %646 = vmatpush1.xpose.msra.mxu0 0.0
        %647 = vmatprep.subr.mxu0 0.0
        %648 = vmatpush1.xpose.msra.mxu0 0.0
        %649 = vmatprep.subr.mxu0 0.0
        %650 = vmatpush1.xpose.msra.mxu0 0.0
        %651 = vmatprep.subr.mxu0 0.0
        %652 = vmatpush1.xpose.msra.mxu0 0.0
        %653 = vmatprep.subr.mxu0 0.0
        %654 = vmatpush1.xpose.msra.mxu0 0.0
        %655 = vmatprep.subr.mxu0 0.0
        %656 = vmatpush1.xpose.msra.mxu0 0.0
        %657 = vmatprep.subr.mxu0 0.0
        %658 = vmatpush1.xpose.msra.mxu0 0.0
        %659 = vmatprep.subr.mxu0 0.0
        %660 = vmatpush1.xpose.msra.mxu0 0.0
        %661 = vmatprep.subr.mxu0 0.0
        %662 = vmatpush1.xpose.msra.mxu0 0.0
        %663 = vmatprep.subr.mxu0 0.0
        %664 = vmatpush1.xpose.msra.mxu0 0.0
        %665 = vmatprep.subr.mxu0 0.0
        %666 = vmatpush1.xpose.msra.mxu0 0.0
        %667 = vmatprep.subr.mxu0 0.0
        %668 = vmatpush1.xpose.msra.mxu0 0.0
        %669 = vmatprep.subr.mxu0 0.0
        %670 = vmatpush1.xpose.msra.mxu0 0.0
        %671 = vmatprep.mubr.f32.mxu0 0.0
        %672 = vmatmul.mubr.f32.gmra.mrb[0].mxu0 %v596
        %v673 = vpop.f32.mrb[0].mxu0
        %v674 = vadd.f32 0.0, %v673
        %v675 = vpop.f32.mrb[0].mxu0
        %676 = vmatprep.mubr.f32.mxu0 0.0
        %677 = vmatmul.mubr.f32.gmra.mrb[0].mxu0 %v599
        %v678 = vpop.f32.mrb[0].mxu0
        %v679 = vadd.f32 0.0, %v678
        %v680 = vpop.f32.mrb[0].mxu0
        %681 = vdwg.mxu0
        %v682 = vld [vmem:[#allocation2] sm:$0xff]
        %v683 = vld [vmem:[#allocation2 + $0x8] sm:$0xff]
        %v684 = vld [vmem:[#allocation2 + $0x10] sm:$0xff]
        %v685 = vld [vmem:[#allocation2 + $0x18] sm:$0xff]
        %v686 = vld [vmem:[#allocation2 + $0x20] sm:$0xff]
        %v687 = vld [vmem:[#allocation2 + $0x28] sm:$0xff]
        %v688 = vld [vmem:[#allocation2 + $0x30] sm:$0xff]
        %v689 = vld [vmem:[#allocation2 + $0x38] sm:$0xff]
        %vm690 = vcmask 130048
        %v691 = vsel %vm690, %v413, -inf
        %692 = vmax.xlane.f32.xlu0 %v691
        %v693 = vpop.xlane.xlu0 %692
        %v694 = vsel %vm690, %v418, -inf
        %695 = vmax.xlane.f32.xlu0 %v694
        %v696 = vpop.xlane.xlu0 %695
        %v697 = vsel %vm690, %v500, -inf
        %698 = vmax.xlane.f32.xlu0 %v697
        %v699 = vpop.xlane.xlu0 %698
        %v700 = vsel %vm690, %v505, -inf
        %701 = vmax.xlane.f32.xlu0 %v700
        %v702 = vpop.xlane.xlu0 %701
        %v703 = vsel %vm690, %v587, -inf
        %704 = vmax.xlane.f32.xlu0 %v703
        %v705 = vpop.xlane.xlu0 %704
        %v706 = vsel %vm690, %v592, -inf
        %707 = vmax.xlane.f32.xlu0 %v706
        %v708 = vpop.xlane.xlu0 %707
        %v709 = vsel %vm690, %v674, -inf
        %710 = vmax.xlane.f32.xlu0 %v709
        %v711 = vpop.xlane.xlu0 %710
        %v712 = vsel %vm690, %v679, -inf
        %713 = vmax.xlane.f32.xlu0 %v712
        %v714 = vpop.xlane.xlu0 %713
        %v715 = vmax.f32 %v682, %v693
        %v716 = vmax.f32 %v683, %v696
        %v717 = vmax.f32 %v684, %v699
        %v718 = vmax.f32 %v685, %v702
        %v719 = vmax.f32 %v686, %v705
        %v720 = vmax.f32 %v687, %v708
        %v721 = vmax.f32 %v688, %v711
        %v722 = vmax.f32 %v689, %v714
        %v723 = vsub.f32 %v682, %v715
        %v724 = vsub.f32 %v683, %v716
        %v725 = vsub.f32 %v684, %v717
        %v726 = vsub.f32 %v685, %v718
        %v727 = vsub.f32 %v686, %v719
        %v728 = vsub.f32 %v687, %v720
        %v729 = vsub.f32 %v688, %v721
        %v730 = vsub.f32 %v689, %v722
        %v731 = vmul.f32 %v723, 1.442695
        %v732 = vpow.pop %v731
        %v733 = vmul.f32 %v724, 1.442695
        %v734 = vpow.pop %v733
        %v735 = vmul.f32 %v725, 1.442695
        %v736 = vpow.pop %v735
        %v737 = vmul.f32 %v726, 1.442695
        %v738 = vpow.pop %v737
        %v739 = vmul.f32 %v727, 1.442695
        %v740 = vpow.pop %v739
        %v741 = vmul.f32 %v728, 1.442695
        %v742 = vpow.pop %v741
        %v743 = vmul.f32 %v729, 1.442695
        %v744 = vpow.pop %v743
        %v745 = vmul.f32 %v730, 1.442695
        %v746 = vpow.pop %v745
        %748 = vset.pattern.permute.xlu0 0
        %749 = vperm.xlu0 %748, %v715
        %v750 = vpop.permute.xlu0 %749
        %753 = vset.pattern.permute.xlu0 0
        %754 = vperm.xlu0 %753, %v716
        %v755 = vpop.permute.xlu0 %754
        %758 = vset.pattern.permute.xlu0 0
        %759 = vperm.xlu0 %758, %v717
        %v760 = vpop.permute.xlu0 %759
        %763 = vset.pattern.permute.xlu0 0
        %764 = vperm.xlu0 %763, %v718
        %v765 = vpop.permute.xlu0 %764
        %768 = vset.pattern.permute.xlu0 0
        %769 = vperm.xlu0 %768, %v719
        %v770 = vpop.permute.xlu0 %769
        %773 = vset.pattern.permute.xlu0 0
        %774 = vperm.xlu0 %773, %v720
        %v775 = vpop.permute.xlu0 %774
        %778 = vset.pattern.permute.xlu0 0
        %779 = vperm.xlu0 %778, %v721
        %v780 = vpop.permute.xlu0 %779
        %783 = vset.pattern.permute.xlu0 0
        %784 = vperm.xlu0 %783, %v722
        %v785 = vpop.permute.xlu0 %784
        %v787 = vsub.f32 %v413, %v750
        %v788 = vsub.f32 %v418, %v755
        %v789 = vsub.f32 %v500, %v760
        %v790 = vsub.f32 %v505, %v765
        %v791 = vsub.f32 %v587, %v770
        %v792 = vsub.f32 %v592, %v775
        %v793 = vsub.f32 %v674, %v780
        %v794 = vsub.f32 %v679, %v785
        %v795 = vmul.f32 %v787, 1.442695
        %v796 = vpow.pop %v795
        %v797 = vmul.f32 %v788, 1.442695
        %v798 = vpow.pop %v797
        %v799 = vmul.f32 %v789, 1.442695
        %v800 = vpow.pop %v799
        %v801 = vmul.f32 %v790, 1.442695
        %v802 = vpow.pop %v801
        %v803 = vmul.f32 %v791, 1.442695
        %v804 = vpow.pop %v803
        %v805 = vmul.f32 %v792, 1.442695
        %v806 = vpow.pop %v805
        %v807 = vmul.f32 %v793, 1.442695
        %v808 = vpow.pop %v807
        %v809 = vmul.f32 %v794, 1.442695
        %v810 = vpow.pop %v809
        %v811 = vld [vmem:[#allocation3] sm:$0xff]
        %v812 = vld [vmem:[#allocation3 + $0x8] sm:$0xff]
        %v813 = vld [vmem:[#allocation3 + $0x10] sm:$0xff]
        %v814 = vld [vmem:[#allocation3 + $0x18] sm:$0xff]
        %v815 = vld [vmem:[#allocation3 + $0x20] sm:$0xff]
        %v816 = vld [vmem:[#allocation3 + $0x28] sm:$0xff]
        %v817 = vld [vmem:[#allocation3 + $0x30] sm:$0xff]
        %v818 = vld [vmem:[#allocation3 + $0x38] sm:$0xff]
        %v819 = vmul.f32 %v732, %v811
        %v820 = vmul.f32 %v734, %v812
        %v821 = vmul.f32 %v736, %v813
        %v822 = vmul.f32 %v738, %v814
        %v823 = vmul.f32 %v740, %v815
        %v824 = vmul.f32 %v742, %v816
        %v825 = vmul.f32 %v744, %v817
        %v826 = vmul.f32 %v746, %v818
        %v827 = vsel %vm690, %v796, 0.0
        %828 = vadd.xlane.f32.xlu0 %v827
        %v829 = vpop.xlane.xlu0 %828
        %v830 = vsel %vm690, %v798, 0.0
        %831 = vadd.xlane.f32.xlu0 %v830
        %v832 = vpop.xlane.xlu0 %831
        %v833 = vsel %vm690, %v800, 0.0
        %834 = vadd.xlane.f32.xlu0 %v833
        %v835 = vpop.xlane.xlu0 %834
        %v836 = vsel %vm690, %v802, 0.0
        %837 = vadd.xlane.f32.xlu0 %v836
        %v838 = vpop.xlane.xlu0 %837
        %v839 = vsel %vm690, %v804, 0.0
        %840 = vadd.xlane.f32.xlu0 %v839
        %v841 = vpop.xlane.xlu0 %840
        %v842 = vsel %vm690, %v806, 0.0
        %843 = vadd.xlane.f32.xlu0 %v842
        %v844 = vpop.xlane.xlu0 %843
        %v845 = vsel %vm690, %v808, 0.0
        %846 = vadd.xlane.f32.xlu0 %v845
        %v847 = vpop.xlane.xlu0 %846
        %v848 = vsel %vm690, %v810, 0.0
        %849 = vadd.xlane.f32.xlu0 %v848
        %v850 = vpop.xlane.xlu0 %849
        %v851 = vadd.f32 %v819, %v829
        %v852 = vadd.f32 %v820, %v832
        %v853 = vadd.f32 %v821, %v835
        %v854 = vadd.f32 %v822, %v838
        %v855 = vadd.f32 %v823, %v841
        %v856 = vadd.f32 %v824, %v844
        %v857 = vadd.f32 %v825, %v847
        %v858 = vadd.f32 %v826, %v850
        %vm859 = vcmask 7168
        %860 = vst.msk [vmem:[#allocation3] sm:$0xff] %vm859, %v851
        %861 = vst.msk [vmem:[#allocation3 + $0x8] sm:$0xff] %vm859, %v852
        %862 = vst.msk [vmem:[#allocation3 + $0x10] sm:$0xff] %vm859, %v853
        %863 = vst.msk [vmem:[#allocation3 + $0x18] sm:$0xff] %vm859, %v854
        %864 = vst.msk [vmem:[#allocation3 + $0x20] sm:$0xff] %vm859, %v855
        %865 = vst.msk [vmem:[#allocation3 + $0x28] sm:$0xff] %vm859, %v856
        %866 = vst.msk [vmem:[#allocation3 + $0x30] sm:$0xff] %vm859, %v857
        %867 = vst.msk [vmem:[#allocation3 + $0x38] sm:$0xff] %vm859, %v858
        %v868 = vld [vmem:[#allocation4] sm:$0xff]
        %v869 = vld [vmem:[#allocation4 + $0x8] sm:$0xff]
        %v870 = vld [vmem:[#allocation4 + $0x10] sm:$0xff]
        %v871 = vld [vmem:[#allocation4 + $0x18] sm:$0xff]
        %v872 = vld [vmem:[#allocation4 + $0x20] sm:$0xff]
        %v873 = vld [vmem:[#allocation4 + $0x28] sm:$0xff]
        %v874 = vld [vmem:[#allocation4 + $0x30] sm:$0xff]
        %v875 = vld [vmem:[#allocation4 + $0x38] sm:$0xff]
        %877 = vset.pattern.permute.xlu0 0
        %878 = vperm.xlu0 %877, %v732
        %v879 = vpop.permute.xlu0 %878
        %882 = vset.pattern.permute.xlu0 0
        %883 = vperm.xlu0 %882, %v734
        %v884 = vpop.permute.xlu0 %883
        %887 = vset.pattern.permute.xlu0 0
        %888 = vperm.xlu0 %887, %v736
        %v889 = vpop.permute.xlu0 %888
        %892 = vset.pattern.permute.xlu0 0
        %893 = vperm.xlu0 %892, %v738
        %v894 = vpop.permute.xlu0 %893
        %897 = vset.pattern.permute.xlu0 0
        %898 = vperm.xlu0 %897, %v740
        %v899 = vpop.permute.xlu0 %898
        %902 = vset.pattern.permute.xlu0 0
        %903 = vperm.xlu0 %902, %v742
        %v904 = vpop.permute.xlu0 %903
        %907 = vset.pattern.permute.xlu0 0
        %908 = vperm.xlu0 %907, %v744
        %v909 = vpop.permute.xlu0 %908
        %912 = vset.pattern.permute.xlu0 0
        %913 = vperm.xlu0 %912, %v746
        %v914 = vpop.permute.xlu0 %913
        %v916 = vmul.f32 %v879, %v868
        %v917 = vmul.f32 %v884, %v869
        %v918 = vmul.f32 %v889, %v870
        %v919 = vmul.f32 %v894, %v871
        %v920 = vmul.f32 %v899, %v872
        %v921 = vmul.f32 %v904, %v873
        %v922 = vmul.f32 %v909, %v874
        %v923 = vmul.f32 %v914, %v875
        %v924 = vld [vmem:[%s276] sm:$0xff]
        %v925 = vld [vmem:[%s276 + $0x8] sm:$0xff]
        %v926 = vld [vmem:[%s276 + $0x10] sm:$0xff]
        %v927 = vld [vmem:[%s276 + $0x18] sm:$0xff]
        %v928 = vld [vmem:[%s276 + $0x20] sm:$0xff]
        %v929 = vld [vmem:[%s276 + $0x28] sm:$0xff]
        %v930 = vld [vmem:[%s276 + $0x30] sm:$0xff]
        %v931 = vld [vmem:[%s276 + $0x38] sm:$0xff]
        %v933 = vsel %vm690, %v796, 0
        %v936 = vsel %vm690, %v798, 0
        %938 = vmatprep.subr.mxu0 0.0
        %939 = vmatpush1.msra.mxu0 %v924
        %940 = vmatprep.subr.mxu0 0.0
        %941 = vmatpush1.msra.mxu0 %v925
        %942 = vmatprep.subr.mxu0 0.0
        %943 = vmatpush1.msra.mxu0 0.0
        %944 = vmatprep.subr.mxu0 0.0
        %945 = vmatpush1.msra.mxu0 0.0
        %946 = vmatprep.subr.mxu0 0.0
        %947 = vmatpush1.msra.mxu0 0.0
        %948 = vmatprep.subr.mxu0 0.0
        %949 = vmatpush1.msra.mxu0 0.0
        %950 = vmatprep.subr.mxu0 0.0
        %951 = vmatpush1.msra.mxu0 0.0
        %952 = vmatprep.subr.mxu0 0.0
        %953 = vmatpush1.msra.mxu0 0.0
        %954 = vmatprep.subr.mxu0 0.0
        %955 = vmatpush1.msra.mxu0 0.0
        %956 = vmatprep.subr.mxu0 0.0
        %957 = vmatpush1.msra.mxu0 0.0
        %958 = vmatprep.subr.mxu0 0.0
        %959 = vmatpush1.msra.mxu0 0.0
        %960 = vmatprep.subr.mxu0 0.0
        %961 = vmatpush1.msra.mxu0 0.0
        %962 = vmatprep.subr.mxu0 0.0
        %963 = vmatpush1.msra.mxu0 0.0
        %964 = vmatprep.subr.mxu0 0.0
        %965 = vmatpush1.msra.mxu0 0.0
        %966 = vmatprep.subr.mxu0 0.0
        %967 = vmatpush1.msra.mxu0 0.0
        %968 = vmatprep.subr.mxu0 0.0
        %969 = vmatpush1.msra.mxu0 0.0
        %970 = vmatprep.subr.mxu0 0.0
        %971 = vmatpush1.msra.mxu0 0.0
        %972 = vmatprep.subr.mxu0 0.0
        %973 = vmatpush1.msra.mxu0 0.0
        %974 = vmatprep.subr.mxu0 0.0
        %975 = vmatpush1.msra.mxu0 0.0
        %976 = vmatprep.subr.mxu0 0.0
        %977 = vmatpush1.msra.mxu0 0.0
        %978 = vmatprep.subr.mxu0 0.0
        %979 = vmatpush1.msra.mxu0 0.0
        %980 = vmatprep.subr.mxu0 0.0
        %981 = vmatpush1.msra.mxu0 0.0
        %982 = vmatprep.subr.mxu0 0.0
        %983 = vmatpush1.msra.mxu0 0.0
        %984 = vmatprep.subr.mxu0 0.0
        %985 = vmatpush1.msra.mxu0 0.0
        %986 = vmatprep.subr.mxu0 0.0
        %987 = vmatpush1.msra.mxu0 0.0
        %988 = vmatprep.subr.mxu0 0.0
        %989 = vmatpush1.msra.mxu0 0.0
        %990 = vmatprep.subr.mxu0 0.0
        %991 = vmatpush1.msra.mxu0 0.0
        %992 = vmatprep.subr.mxu0 0.0
        %993 = vmatpush1.msra.mxu0 0.0
        %994 = vmatprep.subr.mxu0 0.0
        %995 = vmatpush1.msra.mxu0 0.0
        %996 = vmatprep.subr.mxu0 0.0
        %997 = vmatpush1.msra.mxu0 0.0
        %998 = vmatprep.subr.mxu0 0.0
        %999 = vmatpush1.msra.mxu0 0.0
        %1000 = vmatprep.subr.mxu0 0.0
        %1001 = vmatpush1.msra.mxu0 0.0
        %1002 = vmatprep.mubr.f32.mxu0 0.0
        %1003 = vmatmul.mubr.f32.gmra.mrb[0].mxu0 %v933
        %v1004 = vpop.f32.mrb[0].mxu0
        %v1005 = vadd.f32 0.0, %v1004
        %v1006 = vpop.f32.mrb[0].mxu0
        %1007 = vmatprep.mubr.f32.mxu0 0.0
        %1008 = vmatmul.mubr.f32.gmra.mrb[0].mxu0 %v936
        %v1009 = vpop.f32.mrb[0].mxu0
        %v1010 = vadd.f32 0.0, %v1009
        %v1011 = vpop.f32.mrb[0].mxu0
        %1012 = vdwg.mxu0
        %v1014 = vsel %vm690, %v800, 0
        %v1017 = vsel %vm690, %v802, 0
        %1019 = vmatprep.subr.mxu0 0.0
        %1020 = vmatpush1.msra.mxu0 %v926
        %1021 = vmatprep.subr.mxu0 0.0
        %1022 = vmatpush1.msra.mxu0 %v927
        %1023 = vmatprep.subr.mxu0 0.0
        %1024 = vmatpush1.msra.mxu0 0.0
        %1025 = vmatprep.subr.mxu0 0.0
        %1026 = vmatpush1.msra.mxu0 0.0
        %1027 = vmatprep.subr.mxu0 0.0
        %1028 = vmatpush1.msra.mxu0 0.0
        %1029 = vmatprep.subr.mxu0 0.0
        %1030 = vmatpush1.msra.mxu0 0.0
        %1031 = vmatprep.subr.mxu0 0.0
        %1032 = vmatpush1.msra.mxu0 0.0
        %1033 = vmatprep.subr.mxu0 0.0
        %1034 = vmatpush1.msra.mxu0 0.0
        %1035 = vmatprep.subr.mxu0 0.0
        %1036 = vmatpush1.msra.mxu0 0.0
        %1037 = vmatprep.subr.mxu0 0.0
        %1038 = vmatpush1.msra.mxu0 0.0
        %1039 = vmatprep.subr.mxu0 0.0
        %1040 = vmatpush1.msra.mxu0 0.0
        %1041 = vmatprep.subr.mxu0 0.0
        %1042 = vmatpush1.msra.mxu0 0.0
        %1043 = vmatprep.subr.mxu0 0.0
        %1044 = vmatpush1.msra.mxu0 0.0
        %1045 = vmatprep.subr.mxu0 0.0
        %1046 = vmatpush1.msra.mxu0 0.0
        %1047 = vmatprep.subr.mxu0 0.0
        %1048 = vmatpush1.msra.mxu0 0.0
        %1049 = vmatprep.subr.mxu0 0.0
        %1050 = vmatpush1.msra.mxu0 0.0
        %1051 = vmatprep.subr.mxu0 0.0
        %1052 = vmatpush1.msra.mxu0 0.0
        %1053 = vmatprep.subr.mxu0 0.0
        %1054 = vmatpush1.msra.mxu0 0.0
        %1055 = vmatprep.subr.mxu0 0.0
        %1056 = vmatpush1.msra.mxu0 0.0
        %1057 = vmatprep.subr.mxu0 0.0
        %1058 = vmatpush1.msra.mxu0 0.0
        %1059 = vmatprep.subr.mxu0 0.0
        %1060 = vmatpush1.msra.mxu0 0.0
        %1061 = vmatprep.subr.mxu0 0.0
        %1062 = vmatpush1.msra.mxu0 0.0
        %1063 = vmatprep.subr.mxu0 0.0
        %1064 = vmatpush1.msra.mxu0 0.0
        %1065 = vmatprep.subr.mxu0 0.0
        %1066 = vmatpush1.msra.mxu0 0.0
        %1067 = vmatprep.subr.mxu0 0.0
        %1068 = vmatpush1.msra.mxu0 0.0
        %1069 = vmatprep.subr.mxu0 0.0
        %1070 = vmatpush1.msra.mxu0 0.0
        %1071 = vmatprep.subr.mxu0 0.0
        %1072 = vmatpush1.msra.mxu0 0.0
        %1073 = vmatprep.subr.mxu0 0.0
        %1074 = vmatpush1.msra.mxu0 0.0
        %1075 = vmatprep.subr.mxu0 0.0
        %1076 = vmatpush1.msra.mxu0 0.0
        %1077 = vmatprep.subr.mxu0 0.0
        %1078 = vmatpush1.msra.mxu0 0.0
        %1079 = vmatprep.subr.mxu0 0.0
        %1080 = vmatpush1.msra.mxu0 0.0
        %1081 = vmatprep.subr.mxu0 0.0
        %1082 = vmatpush1.msra.mxu0 0.0
        %1083 = vmatprep.mubr.f32.mxu0 0.0
        %1084 = vmatmul.mubr.f32.gmra.mrb[0].mxu0 %v1014
        %v1085 = vpop.f32.mrb[0].mxu0
        %v1086 = vadd.f32 0.0, %v1085
        %v1087 = vpop.f32.mrb[0].mxu0
        %1088 = vmatprep.mubr.f32.mxu0 0.0
        %1089 = vmatmul.mubr.f32.gmra.mrb[0].mxu0 %v1017
        %v1090 = vpop.f32.mrb[0].mxu0
        %v1091 = vadd.f32 0.0, %v1090
        %v1092 = vpop.f32.mrb[0].mxu0
        %1093 = vdwg.mxu0
        %v1095 = vsel %vm690, %v804, 0
        %v1098 = vsel %vm690, %v806, 0
        %1100 = vmatprep.subr.mxu0 0.0
        %1101 = vmatpush1.msra.mxu0 %v928
        %1102 = vmatprep.subr.mxu0 0.0
        %1103 = vmatpush1.msra.mxu0 %v929
        %1104 = vmatprep.subr.mxu0 0.0
        %1105 = vmatpush1.msra.mxu0 0.0
        %1106 = vmatprep.subr.mxu0 0.0
        %1107 = vmatpush1.msra.mxu0 0.0
        %1108 = vmatprep.subr.mxu0 0.0
        %1109 = vmatpush1.msra.mxu0 0.0
        %1110 = vmatprep.subr.mxu0 0.0
        %1111 = vmatpush1.msra.mxu0 0.0
        %1112 = vmatprep.subr.mxu0 0.0
        %1113 = vmatpush1.msra.mxu0 0.0
        %1114 = vmatprep.subr.mxu0 0.0
        %1115 = vmatpush1.msra.mxu0 0.0
        %1116 = vmatprep.subr.mxu0 0.0
        %1117 = vmatpush1.msra.mxu0 0.0
        %1118 = vmatprep.subr.mxu0 0.0
        %1119 = vmatpush1.msra.mxu0 0.0
        %1120 = vmatprep.subr.mxu0 0.0
        %1121 = vmatpush1.msra.mxu0 0.0
        %1122 = vmatprep.subr.mxu0 0.0
        %1123 = vmatpush1.msra.mxu0 0.0
        %1124 = vmatprep.subr.mxu0 0.0
        %1125 = vmatpush1.msra.mxu0 0.0
        %1126 = vmatprep.subr.mxu0 0.0
        %1127 = vmatpush1.msra.mxu0 0.0
        %1128 = vmatprep.subr.mxu0 0.0
        %1129 = vmatpush1.msra.mxu0 0.0
        %1130 = vmatprep.subr.mxu0 0.0
        %1131 = vmatpush1.msra.mxu0 0.0
        %1132 = vmatprep.subr.mxu0 0.0
        %1133 = vmatpush1.msra.mxu0 0.0
        %1134 = vmatprep.subr.mxu0 0.0
        %1135 = vmatpush1.msra.mxu0 0.0
        %1136 = vmatprep.subr.mxu0 0.0
        %1137 = vmatpush1.msra.mxu0 0.0
        %1138 = vmatprep.subr.mxu0 0.0
        %1139 = vmatpush1.msra.mxu0 0.0
        %1140 = vmatprep.subr.mxu0 0.0
        %1141 = vmatpush1.msra.mxu0 0.0
        %1142 = vmatprep.subr.mxu0 0.0
        %1143 = vmatpush1.msra.mxu0 0.0
        %1144 = vmatprep.subr.mxu0 0.0
        %1145 = vmatpush1.msra.mxu0 0.0
        %1146 = vmatprep.subr.mxu0 0.0
        %1147 = vmatpush1.msra.mxu0 0.0
        %1148 = vmatprep.subr.mxu0 0.0
        %1149 = vmatpush1.msra.mxu0 0.0
        %1150 = vmatprep.subr.mxu0 0.0
        %1151 = vmatpush1.msra.mxu0 0.0
        %1152 = vmatprep.subr.mxu0 0.0
        %1153 = vmatpush1.msra.mxu0 0.0
        %1154 = vmatprep.subr.mxu0 0.0
        %1155 = vmatpush1.msra.mxu0 0.0
        %1156 = vmatprep.subr.mxu0 0.0
        %1157 = vmatpush1.msra.mxu0 0.0
        %1158 = vmatprep.subr.mxu0 0.0
        %1159 = vmatpush1.msra.mxu0 0.0
        %1160 = vmatprep.subr.mxu0 0.0
        %1161 = vmatpush1.msra.mxu0 0.0
        %1162 = vmatprep.subr.mxu0 0.0
        %1163 = vmatpush1.msra.mxu0 0.0
        %1164 = vmatprep.mubr.f32.mxu0 0.0
        %1165 = vmatmul.mubr.f32.gmra.mrb[0].mxu0 %v1095
        %v1166 = vpop.f32.mrb[0].mxu0
        %v1167 = vadd.f32 0.0, %v1166
        %v1168 = vpop.f32.mrb[0].mxu0
        %1169 = vmatprep.mubr.f32.mxu0 0.0
        %1170 = vmatmul.mubr.f32.gmra.mrb[0].mxu0 %v1098
        %v1171 = vpop.f32.mrb[0].mxu0
        %v1172 = vadd.f32 0.0, %v1171
        %v1173 = vpop.f32.mrb[0].mxu0
        %1174 = vdwg.mxu0
        %v1176 = vsel %vm690, %v808, 0
        %v1179 = vsel %vm690, %v810, 0
        %1181 = vmatprep.subr.mxu0 0.0
        %1182 = vmatpush1.msra.mxu0 %v930
        %1183 = vmatprep.subr.mxu0 0.0
        %1184 = vmatpush1.msra.mxu0 %v931
        %1185 = vmatprep.subr.mxu0 0.0
        %1186 = vmatpush1.msra.mxu0 0.0
        %1187 = vmatprep.subr.mxu0 0.0
        %1188 = vmatpush1.msra.mxu0 0.0
        %1189 = vmatprep.subr.mxu0 0.0
        %1190 = vmatpush1.msra.mxu0 0.0
        %1191 = vmatprep.subr.mxu0 0.0
        %1192 = vmatpush1.msra.mxu0 0.0
        %1193 = vmatprep.subr.mxu0 0.0
        %1194 = vmatpush1.msra.mxu0 0.0
        %1195 = vmatprep.subr.mxu0 0.0
        %1196 = vmatpush1.msra.mxu0 0.0
        %1197 = vmatprep.subr.mxu0 0.0
        %1198 = vmatpush1.msra.mxu0 0.0
        %1199 = vmatprep.subr.mxu0 0.0
        %1200 = vmatpush1.msra.mxu0 0.0
        %1201 = vmatprep.subr.mxu0 0.0
        %1202 = vmatpush1.msra.mxu0 0.0
        %1203 = vmatprep.subr.mxu0 0.0
        %1204 = vmatpush1.msra.mxu0 0.0
        %1205 = vmatprep.subr.mxu0 0.0
        %1206 = vmatpush1.msra.mxu0 0.0
        %1207 = vmatprep.subr.mxu0 0.0
        %1208 = vmatpush1.msra.mxu0 0.0
        %1209 = vmatprep.subr.mxu0 0.0
        %1210 = vmatpush1.msra.mxu0 0.0
        %1211 = vmatprep.subr.mxu0 0.0
        %1212 = vmatpush1.msra.mxu0 0.0
        %1213 = vmatprep.subr.mxu0 0.0
        %1214 = vmatpush1.msra.mxu0 0.0
        %1215 = vmatprep.subr.mxu0 0.0
        %1216 = vmatpush1.msra.mxu0 0.0
        %1217 = vmatprep.subr.mxu0 0.0
        %1218 = vmatpush1.msra.mxu0 0.0
        %1219 = vmatprep.subr.mxu0 0.0
        %1220 = vmatpush1.msra.mxu0 0.0
        %1221 = vmatprep.subr.mxu0 0.0
        %1222 = vmatpush1.msra.mxu0 0.0
        %1223 = vmatprep.subr.mxu0 0.0
        %1224 = vmatpush1.msra.mxu0 0.0
        %1225 = vmatprep.subr.mxu0 0.0
        %1226 = vmatpush1.msra.mxu0 0.0
        %1227 = vmatprep.subr.mxu0 0.0
        %1228 = vmatpush1.msra.mxu0 0.0
        %1229 = vmatprep.subr.mxu0 0.0
        %1230 = vmatpush1.msra.mxu0 0.0
        %1231 = vmatprep.subr.mxu0 0.0
        %1232 = vmatpush1.msra.mxu0 0.0
        %1233 = vmatprep.subr.mxu0 0.0
        %1234 = vmatpush1.msra.mxu0 0.0
        %1235 = vmatprep.subr.mxu0 0.0
        %1236 = vmatpush1.msra.mxu0 0.0
        %1237 = vmatprep.subr.mxu0 0.0
        %1238 = vmatpush1.msra.mxu0 0.0
        %1239 = vmatprep.subr.mxu0 0.0
        %1240 = vmatpush1.msra.mxu0 0.0
        %1241 = vmatprep.subr.mxu0 0.0
        %1242 = vmatpush1.msra.mxu0 0.0
        %1243 = vmatprep.subr.mxu0 0.0
        %1244 = vmatpush1.msra.mxu0 0.0
        %1245 = vmatprep.mubr.f32.mxu0 0.0
        %1246 = vmatmul.mubr.f32.gmra.mrb[0].mxu0 %v1176
        %v1247 = vpop.f32.mrb[0].mxu0
        %v1248 = vadd.f32 0.0, %v1247
        %v1249 = vpop.f32.mrb[0].mxu0
        %1250 = vmatprep.mubr.f32.mxu0 0.0
        %1251 = vmatmul.mubr.f32.gmra.mrb[0].mxu0 %v1179
        %v1252 = vpop.f32.mrb[0].mxu0
        %v1253 = vadd.f32 0.0, %v1252
        %v1254 = vpop.f32.mrb[0].mxu0
        %1255 = vdwg.mxu0
        %v1256 = vadd.f32 %v916, %v1005
        %v1257 = vadd.f32 %v917, %v1010
        %v1258 = vadd.f32 %v918, %v1086
        %v1259 = vadd.f32 %v919, %v1091
        %v1260 = vadd.f32 %v920, %v1167
        %v1261 = vadd.f32 %v921, %v1172
        %v1262 = vadd.f32 %v922, %v1248
        %v1263 = vadd.f32 %v923, %v1253
        %1264 = vst.msk [vmem:[#allocation4] sm:$0xff] %vm333, %v1256
        %1265 = vst.msk [vmem:[#allocation4 + $0x8] sm:$0xff] %vm333, %v1257
        %1266 = vst.msk [vmem:[#allocation4 + $0x10] sm:$0xff] %vm333, %v1258
        %1267 = vst.msk [vmem:[#allocation4 + $0x18] sm:$0xff] %vm333, %v1259
        %1268 = vst.msk [vmem:[#allocation4 + $0x20] sm:$0xff] %vm333, %v1260
        %1269 = vst.msk [vmem:[#allocation4 + $0x28] sm:$0xff] %vm333, %v1261
        %1270 = vst.msk [vmem:[#allocation4 + $0x30] sm:$0xff] %vm333, %v1262
        %1271 = vst.msk [vmem:[#allocation4 + $0x38] sm:$0xff] %vm333, %v1263
        %1272 = vst.msk [vmem:[#allocation2] sm:$0xff] %vm859, %v715
        %1273 = vst.msk [vmem:[#allocation2 + $0x8] sm:$0xff] %vm859, %v716
        %1274 = vst.msk [vmem:[#allocation2 + $0x10] sm:$0xff] %vm859, %v717
        %1275 = vst.msk [vmem:[#allocation2 + $0x18] sm:$0xff] %vm859, %v718
        %1276 = vst.msk [vmem:[#allocation2 + $0x20] sm:$0xff] %vm859, %v719
        %1277 = vst.msk [vmem:[#allocation2 + $0x28] sm:$0xff] %vm859, %v720
        %1278 = vst.msk [vmem:[#allocation2 + $0x30] sm:$0xff] %vm859, %v721
        %1279 = vst.msk [vmem:[#allocation2 + $0x38] sm:$0xff] %vm859, %v722
        // Predicated region
        $region37: #{tpu_custom_call.1} parent=31 // pred_check
          %p1280 = pneg %p279
        $region38: #{tpu_custom_call.1} parent=31 // pred_check_branch
          %1282 = sbr.rel (%p1280) target = $region40
        $region39: #{tpu_custom_call.1} parent=31 // pred_region
          %v1283 = vld [vmem:[#allocation4] sm:$0xff]
          %v1284 = vld [vmem:[#allocation4 + $0x8] sm:$0xff]
          %v1285 = vld [vmem:[#allocation4 + $0x10] sm:$0xff]
          %v1286 = vld [vmem:[#allocation4 + $0x18] sm:$0xff]
          %v1287 = vld [vmem:[#allocation4 + $0x20] sm:$0xff]
          %v1288 = vld [vmem:[#allocation4 + $0x28] sm:$0xff]
          %v1289 = vld [vmem:[#allocation4 + $0x30] sm:$0xff]
          %v1290 = vld [vmem:[#allocation4 + $0x38] sm:$0xff]
          %v1291 = vld [vmem:[#allocation3] sm:$0xff]
          %v1292 = vld [vmem:[#allocation3 + $0x8] sm:$0xff]
          %v1293 = vld [vmem:[#allocation3 + $0x10] sm:$0xff]
          %v1294 = vld [vmem:[#allocation3 + $0x18] sm:$0xff]
          %v1295 = vld [vmem:[#allocation3 + $0x20] sm:$0xff]
          %v1296 = vld [vmem:[#allocation3 + $0x28] sm:$0xff]
          %v1297 = vld [vmem:[#allocation3 + $0x30] sm:$0xff]
          %v1298 = vld [vmem:[#allocation3 + $0x38] sm:$0xff]
          %v1299 = vrcp.pop %v1291
          %v1300 = vrcp.pop %v1292
          %v1301 = vrcp.pop %v1293
          %v1302 = vrcp.pop %v1294
          %v1303 = vrcp.pop %v1295
          %v1304 = vrcp.pop %v1296
          %v1305 = vrcp.pop %v1297
          %v1306 = vrcp.pop %v1298
          %1308 = vset.pattern.permute.xlu0 0
          %1309 = vperm.xlu0 %1308, %v1299
          %v1310 = vpop.permute.xlu0 %1309
          %1313 = vset.pattern.permute.xlu0 0
          %1314 = vperm.xlu0 %1313, %v1300
          %v1315 = vpop.permute.xlu0 %1314
          %1318 = vset.pattern.permute.xlu0 0
          %1319 = vperm.xlu0 %1318, %v1301
          %v1320 = vpop.permute.xlu0 %1319
          %1323 = vset.pattern.permute.xlu0 0
          %1324 = vperm.xlu0 %1323, %v1302
          %v1325 = vpop.permute.xlu0 %1324
          %1328 = vset.pattern.permute.xlu0 0
          %1329 = vperm.xlu0 %1328, %v1303
          %v1330 = vpop.permute.xlu0 %1329
          %1333 = vset.pattern.permute.xlu0 0
          %1334 = vperm.xlu0 %1333, %v1304
          %v1335 = vpop.permute.xlu0 %1334
          %1338 = vset.pattern.permute.xlu0 0
          %1339 = vperm.xlu0 %1338, %v1305
          %v1340 = vpop.permute.xlu0 %1339
          %1343 = vset.pattern.permute.xlu0 0
          %1344 = vperm.xlu0 %1343, %v1306
          %v1345 = vpop.permute.xlu0 %1344
          %v1347 = vmul.f32 %v1283, %v1310
          %v1348 = vmul.f32 %v1284, %v1315
          %v1349 = vmul.f32 %v1285, %v1320
          %v1350 = vmul.f32 %v1286, %v1325
          %v1351 = vmul.f32 %v1287, %v1330
          %v1352 = vmul.f32 %v1288, %v1335
          %v1353 = vmul.f32 %v1289, %v1340
          %v1354 = vmul.f32 %v1290, %v1345
          %1357 = vrot.lane.b32.xlu0 %v1349, 8
          %v1358 = vpop.permute.xlu0 %1357
          %1359 = vrot.lane.b32.xlu0 %v1350, 8
          %v1360 = vpop.permute.xlu0 %1359
          %1365 = vrot.lane.b32.xlu0 %v1351, 16
          %v1366 = vpop.permute.xlu0 %1365
          %1367 = vrot.lane.b32.xlu0 %v1352, 16
          %v1368 = vpop.permute.xlu0 %1367
          %1373 = vrot.lane.b32.xlu0 %v1353, 24
          %v1374 = vpop.permute.xlu0 %1373
          %1375 = vrot.lane.b32.xlu0 %v1354, 24
          %v1376 = vpop.permute.xlu0 %1375
          %v1379 = vsel %vm333, %v1347, %v1358
          %v1380 = vsel %vm333, %v1348, %v1360
          %v1381 = vsel %vm690, %v1379, %v1366
          %v1382 = vsel %vm690, %v1380, %v1368
          %vm1383 = vcmask 195584
          %v1384 = vsel %vm1383, %v1381, %v1374
          %v1385 = vsel %vm1383, %v1382, %v1376
          %vm1386 = vcmask 261120
          %1387 = vst.msk [vmem:[%s247] sm:$0xff] %vm1386, %v1384
          %1388 = vst.msk [vmem:[%s247 + $0x8] sm:$0xff] %vm1386, %v1385
        $region40: #{tpu_custom_call.1} parent=31 // pred_fallthru
          _
        %s1389 = sand.u32 %s130, 1
        %s1390 = scalar_lea.sflag [#allocation6], %s1389
        %s1391 = sand.u32 %s130, 1
        %s1392 = smul.addr %s1391, 16
        %s1393 = scalar_lea.vmem [#allocation5], %s1392
        // Predicated region
        $region41: #{tpu_custom_call.1} parent=31 // pred_check
          %p1394 = pneg %p140
        $region42: #{tpu_custom_call.1} parent=31 // pred_check_branch
          %1396 = sbr.rel (%p1394) target = $region44
        $region43: #{tpu_custom_call.1} parent=31 // pred_region
          %s1397 = smul.u32 2, %s23
          %s1399 = ssub.s32 256, 256
          %1400 = vsyncadd %s1390, %s1399
          %s1401 = smul.addr %s22, 2
          %s1402 = sadd.s32 %s1397, %s1401
          %s1403 = smul.addr %s1402, 128
          %s1404 = scalar_lea.hbm %s3, %s1403
          %s1405 = sshll.u32 %s1393, 4
          %s1406 = int_to_ptr.vmem [resolvable:$true] %s1405
          %1411 = dma.vmem_to_hbm [thread:$0]  %s1406, 256, %s1404, %s1390, 128, 128, 8
        $region44: #{tpu_custom_call.1} parent=31 // pred_fallthru
          _
      $region32: #{tpu_custom_call.1} parent=5 // pred_fallthru
        _
      %p1412 = scmp.le.s32.totalorder 2, %s12
      // Predicated region
      $region45: #{tpu_custom_call.1} parent=5 // pred_check
        %p1413 = pneg %p1412
      $region46: #{tpu_custom_call.1} parent=5 // pred_check_branch
        %1415 = sbr.rel (%p1413) target = $region48
      $region47: #{tpu_custom_call.1} parent=5 // pred_region
        %s1416 = ssub.s32 %s12, 2
        // Predicated region
        $region49: #{tpu_custom_call.1} parent=47 // pred_check
          %p1417 = pneg %p146
        $region50: #{tpu_custom_call.1} parent=47 // pred_check_branch
          %1419 = sbr.rel (%p1417) target = $region52
        $region51: #{tpu_custom_call.1} parent=47 // pred_region
          %s1420 = sand.u32 %s131, 1
          %s1421 = scalar_lea.sflag [#allocation6], %s1420
          %s1422 = sand.u32 %s131, 1
          %s1423 = smul.addr %s1422, 16
          %s1424 = scalar_lea.vmem [#allocation5], %s1423
          %1425 = dma.done %s1421, 256
        $region52: #{tpu_custom_call.1} parent=47 // pred_fallthru
          _
      $region48: #{tpu_custom_call.1} parent=5 // pred_fallthru
        _
    $region6: #{tpu_custom_call.1} parent=1 // loop_footer
      %s16 = sadd.s32 1, %s12
    $region7: #{tpu_custom_call.1} parent=1 // loop_footer_branch
      %11 = sbr.rel target = $region3
    $region8: #{tpu_custom_call.1} parent=1 // loop_exit
      _
    %1426 = vsyncpa [#allocation6], 1
    %s1427 = scalar_lea.sflag [#allocation6], 1
    %1428 = vsyncpa %s1427, 1

</llo_original>
